<compile_context>
chip_gen: v7x
topology: tpu7x:2x2x1
jax: 0.10.0
libtpu: 0.0.40
codegen_flags: <defaults>
</compile_context>

<pallas_src>
import functools

import jax
import jax.numpy as jnp
from jax.experimental import pallas as pl
from jax.experimental.pallas import tpu as pltpu

INPUT_SIZE = 256
HIDDEN_SIZE = 512
OUTPUT_SIZE = 256


def _round_up(n, m):
    return ((n + m - 1) // m) * m


def _num_tensorcores() -> int:
    """Best-effort TensorCores per device (v5e/v6e: 1, v7x: 2). Conservative fallback: 1."""
    try:
        dev = jax.devices()[0]
        n = getattr(dev, "num_cores", None)
        if isinstance(n, int) and n > 0:
            return n
        kind = str(getattr(dev, "device_kind", "")).lower()
        if "v7" in kind:
            return 2
    except Exception:
        pass
    return 1


def _choose_block_m(batch: int, num_cores: int, max_block_m: int) -> int:
    """Pick the batch tile (the M dim of the three chained MXU matmuls)."""
    rows = _round_up(max(batch, 1), 8)  # sublane-aligned row count
    if num_cores > 1 and rows > 256 * num_cores:
        # Multi-TC chip (v7x): aim for >= 2 grid steps per core so the "parallel" axis
        # shards across both TensorCores and each core still double-buffers its x tile.
        # Never shrink a step below 256 rows.
        bm = _round_up(pl.cdiv(rows, 2 * num_cores), 256)
        bm = max(256, min(bm, max_block_m))
    else:
        # Single-TC chip (v5e/v6e) or small batch: biggest tile that covers the batch.
        # Splitting here only adds ~0.35us per grid step and shrinks M for the MXU.
        bm = min(max_block_m, rows)
    return _round_up(bm, 8)


def _mlp_kernel(x_ref, w1_ref, b1_ref, w2_ref, b2_ref, w3_ref, b3_ref, o_ref):
    # Three fused matmuls on the MXU: bf16 operands, f32 accumulation.
    # Casts happen on the VMEM tile (no wrapper-side HBM round trips); bias-add + ReLU
    # stay in f32 (v5e VPU has no bf16), cast back to bf16 only as the next matmul operand.
    # TODO(synk): optional v5e micro-opt - interleave two M-halves with an unrolled
    # fori_loop so the VPU epilogue of one half hides under the MXU of the other.
    x = x_ref[...].astype(jnp.bfloat16)
    w1 = w1_ref[...].astype(jnp.bfloat16)
    w2 = w2_ref[...].astype(jnp.bfloat16)
    w3 = w3_ref[...].astype(jnp.bfloat16)
    b1 = b1_ref[...].astype(jnp.float32)
    b2 = b2_ref[...].astype(jnp.float32)
    b3 = b3_ref[...].astype(jnp.float32)

    h1 = jnp.dot(x, w1, preferred_element_type=jnp.float32) + b1
    h1 = jnp.maximum(h1, 0.0).astype(jnp.bfloat16)

    h2 = jnp.dot(h1, w2, preferred_element_type=jnp.float32) + b2
    h2 = jnp.maximum(h2, 0.0).astype(jnp.bfloat16)

    out = jnp.dot(h2, w3, preferred_element_type=jnp.float32) + b3
    o_ref[...] = out.astype(o_ref.dtype)


@functools.partial(jax.jit, static_argnames=("out_dtype", "max_block_m"))
def audio_enhancer_forward(x, w1, b1, w2, b2, w3, b3, *, out_dtype=None, max_block_m=1024):
    B, D_in = x.shape
    assert D_in == INPUT_SIZE
    out_dtype = x.dtype if out_dtype is None else out_dtype

    bm = _choose_block_m(B, _num_tensorcores(), max_block_m)
    grid = (pl.cdiv(B, bm),)  # ragged last tile: OOB rows are masked on writeback

    # Weights / biases are tiny (<2 MiB total) and grid-invariant: constant index_map
    # keeps them resident in VMEM across grid steps (no re-DMA).
    def full_spec(shape):
        return pl.BlockSpec(shape, lambda i: (0, 0))

    return pl.pallas_call(
        _mlp_kernel,
        out_shape=jax.ShapeDtypeStruct((B, OUTPUT_SIZE), out_dtype),
        grid_spec=pltpu.PrefetchScalarGridSpec(
            num_scalar_prefetch=0,
            grid=grid,
            in_specs=[
                pl.BlockSpec((bm, INPUT_SIZE), lambda i: (i, 0)),
                full_spec((INPUT_SIZE, HIDDEN_SIZE)),
                full_spec((1, HIDDEN_SIZE)),
                full_spec((HIDDEN_SIZE, HIDDEN_SIZE // 2)),
                full_spec((1, HIDDEN_SIZE // 2)),
                full_spec((HIDDEN_SIZE // 2, OUTPUT_SIZE)),
                full_spec((1, OUTPUT_SIZE)),
            ],
            out_specs=pl.BlockSpec((bm, OUTPUT_SIZE), lambda i: (i, 0)),
        ),
        compiler_params=pltpu.CompilerParams(
            dimension_semantics=("parallel",),
            vmem_limit_bytes=32 * 1024 * 1024,  # per-step footprint ~12 MiB at bm=1024
        ),
    )(x, w1, b1, w2, b2, w3, b3)


def _init_linear(key, fan_in, fan_out, dtype=jnp.float32):
    # Deterministic init mimicking torch.nn.Linear: U(-1/sqrt(fan_in), 1/sqrt(fan_in)).
    kw, kb = jax.random.split(key)
    bound = 1.0 / (fan_in ** 0.5)
    w = jax.random.uniform(kw, (fan_in, fan_out), dtype, minval=-bound, maxval=bound)
    b = jax.random.uniform(kb, (1, fan_out), dtype, minval=-bound, maxval=bound)
    return w, b


def _reference_f32(x, w1, b1, w2, b2, w3, b3):
    h1 = jnp.maximum(x @ w1 + b1, 0.0)
    h2 = jnp.maximum(h1 @ w2 + b2, 0.0)
    return h2 @ w3 + b3


def _reference_bf16(x, w1, b1, w2, b2, w3, b3):
    # Same numerics as the kernel: bf16 operands, f32 accumulation, f32 bias/ReLU.
    xb = x.astype(jnp.bfloat16)
    w1b, w2b, w3b = (w.astype(jnp.bfloat16) for w in (w1, w2, w3))
    h1 = jnp.maximum(jnp.dot(xb, w1b, preferred_element_type=jnp.float32) + b1, 0.0)
    h1 = h1.astype(jnp.bfloat16)
    h2 = jnp.maximum(jnp.dot(h1, w2b, preferred_element_type=jnp.float32) + b2, 0.0)
    h2 = h2.astype(jnp.bfloat16)
    return jnp.dot(h2, w3b, preferred_element_type=jnp.float32) + b3


if __name__ == "__main__":
    key = jax.random.PRNGKey(0)
    kx, k1, k2, k3 = jax.random.split(key, 4)

    w1, b1 = _init_linear(k1, INPUT_SIZE, HIDDEN_SIZE)
    w2, b2 = _init_linear(k2, HIDDEN_SIZE, HIDDEN_SIZE // 2)
    w3, b3 = _init_linear(k3, HIDDEN_SIZE // 2, OUTPUT_SIZE)

    # --- single ragged tile (batch not a multiple of 8 or the tile) ------------------
    batch = 300
    x = jax.random.normal(kx, (batch, INPUT_SIZE), jnp.float32)

    out = jax.block_until_ready(audio_enhancer_forward(x, w1, b1, w2, b2, w3, b3))
    assert out.shape == (batch, OUTPUT_SIZE) and out.dtype == jnp.float32

    ref_bf16 = _reference_bf16(x, w1, b1, w2, b2, w3, b3)
    assert jnp.allclose(out, ref_bf16, atol=2e-3, rtol=2e-3)
    ref_f32 = _reference_f32(x, w1, b1, w2, b2, w3, b3)
    assert jnp.allclose(out, ref_f32, atol=5e-2, rtol=5e-2)

    # --- multi-step grid with a ragged last tile --------------------------------------
    batch2 = 2304
    x2 = jax.random.normal(kx, (batch2, INPUT_SIZE), jnp.float32)
    out2 = jax.block_until_ready(audio_enhancer_forward(x2, w1, b1, w2, b2, w3, b3))
    assert out2.shape == (batch2, OUTPUT_SIZE)
    ref2 = _reference_bf16(x2, w1, b1, w2, b2, w3, b3)
    assert jnp.allclose(out2, ref2, atol=2e-3, rtol=2e-3)

    # --- optional bf16 output path (halves writeback traffic on v6e/v7x) --------------
    out_bf16 = jax.block_until_ready(
        audio_enhancer_forward(x, w1, b1, w2, b2, w3, b3, out_dtype=jnp.bfloat16))
    assert out_bf16.dtype == jnp.bfloat16 and out_bf16.shape == (batch, OUTPUT_SIZE)
    assert jnp.allclose(out_bf16.astype(jnp.float32), ref_bf16, atol=2e-2, rtol=2e-2)

    print("KERNEL_OK")
</pallas_src>

<mosaic_0001>
module attributes {stable_mosaic.version = 11 : i64} {
  func.func @_mlp_kernel(%arg0: i32, %arg1: memref<304x256xf32, #tpu.memory_space<vmem>>, %arg2: memref<256x512xf32, #tpu.memory_space<vmem>>, %arg3: memref<1x512xf32, #tpu.memory_space<vmem>>, %arg4: memref<512x256xf32, #tpu.memory_space<vmem>>, %arg5: memref<1x256xf32, #tpu.memory_space<vmem>>, %arg6: memref<256x256xf32, #tpu.memory_space<vmem>>, %arg7: memref<1x256xf32, #tpu.memory_space<vmem>>, %arg8: memref<304x256xf32, #tpu.memory_space<vmem>>) attributes {dimension_semantics = [#tpu.dimension_semantics<parallel>], iteration_bounds = array<i64: 1>, scalar_prefetch = 0 : i64, scratch_operands = 0 : i64, tpu.core_type = #tpu.core_type<tc>, window_params = [{transform_indices = @transform_0, window_bounds = array<i64: 304, 256>}, {pipeline_mode = #tpu.pipeline_mode<synchronous>, transform_indices = @transform_1, window_bounds = array<i64: 256, 512>}, {pipeline_mode = #tpu.pipeline_mode<synchronous>, transform_indices = @transform_2, window_bounds = array<i64: 1, 512>}, {pipeline_mode = #tpu.pipeline_mode<synchronous>, transform_indices = @transform_3, window_bounds = array<i64: 512, 256>}, {pipeline_mode = #tpu.pipeline_mode<synchronous>, transform_indices = @transform_4, window_bounds = array<i64: 1, 256>}, {pipeline_mode = #tpu.pipeline_mode<synchronous>, transform_indices = @transform_5, window_bounds = array<i64: 256, 256>}, {pipeline_mode = #tpu.pipeline_mode<synchronous>, transform_indices = @transform_6, window_bounds = array<i64: 1, 256>}, {transform_indices = @transform_7, window_bounds = array<i64: 304, 256>}]} {
    %c0 = arith.constant 0 : index
    %c0_0 = arith.constant 0 : index
    %0 = vector.load %arg1[%c0, %c0_0] : memref<304x256xf32, #tpu.memory_space<vmem>>, vector<304x256xf32>
    %1 = arith.truncf %0 : vector<304x256xf32> to vector<304x256xbf16>
    %c0_1 = arith.constant 0 : index
    %c0_2 = arith.constant 0 : index
    %2 = vector.load %arg2[%c0_1, %c0_2] : memref<256x512xf32, #tpu.memory_space<vmem>>, vector<256x512xf32>
    %3 = arith.truncf %2 : vector<256x512xf32> to vector<256x512xbf16>
    %c0_3 = arith.constant 0 : index
    %c0_4 = arith.constant 0 : index
    %4 = vector.load %arg4[%c0_3, %c0_4] : memref<512x256xf32, #tpu.memory_space<vmem>>, vector<512x256xf32>
    %5 = arith.truncf %4 : vector<512x256xf32> to vector<512x256xbf16>
    %c0_5 = arith.constant 0 : index
    %c0_6 = arith.constant 0 : index
    %6 = vector.load %arg6[%c0_5, %c0_6] : memref<256x256xf32, #tpu.memory_space<vmem>>, vector<256x256xf32>
    %7 = arith.truncf %6 : vector<256x256xf32> to vector<256x256xbf16>
    %c0_7 = arith.constant 0 : index
    %c0_8 = arith.constant 0 : index
    %8 = vector.load %arg3[%c0_7, %c0_8] : memref<1x512xf32, #tpu.memory_space<vmem>>, vector<1x512xf32>
    %c0_9 = arith.constant 0 : index
    %c0_10 = arith.constant 0 : index
    %9 = vector.load %arg5[%c0_9, %c0_10] : memref<1x256xf32, #tpu.memory_space<vmem>>, vector<1x256xf32>
    %c0_11 = arith.constant 0 : index
    %c0_12 = arith.constant 0 : index
    %10 = vector.load %arg7[%c0_11, %c0_12] : memref<1x256xf32, #tpu.memory_space<vmem>>, vector<1x256xf32>
    %cst = arith.constant dense<0.000000e+00> : vector<304x512xf32>
    %11 = tpu.matmul %1, %3, %cst {dimension_numbers = #tpu.dot_dimension_numbers<[1], [0], [0], [1], [0, 0, 1, 1], [], []>} : vector<304x256xbf16>, vector<256x512xbf16>, vector<304x512xf32> -> vector<304x512xf32>
    %12 = vector.broadcast %8 : vector<1x512xf32> to vector<304x512xf32>
    %13 = arith.addf %11, %12 : vector<304x512xf32>
    %cst_13 = arith.constant 0.000000e+00 : f32
    %14 = vector.broadcast %cst_13 : f32 to vector<304x512xf32>
    %15 = arith.maximumf %13, %14 : vector<304x512xf32>
    %16 = arith.truncf %15 : vector<304x512xf32> to vector<304x512xbf16>
    %cst_14 = arith.constant dense<0.000000e+00> : vector<304x256xf32>
    %17 = tpu.matmul %16, %5, %cst_14 {dimension_numbers = #tpu.dot_dimension_numbers<[1], [0], [0], [1], [0, 0, 1, 1], [], []>} : vector<304x512xbf16>, vector<512x256xbf16>, vector<304x256xf32> -> vector<304x256xf32>
    %18 = vector.broadcast %9 : vector<1x256xf32> to vector<304x256xf32>
    %19 = arith.addf %17, %18 : vector<304x256xf32>
    %cst_15 = arith.constant 0.000000e+00 : f32
    %20 = vector.broadcast %cst_15 : f32 to vector<304x256xf32>
    %21 = arith.maximumf %19, %20 : vector<304x256xf32>
    %22 = arith.truncf %21 : vector<304x256xf32> to vector<304x256xbf16>
    %cst_16 = arith.constant dense<0.000000e+00> : vector<304x256xf32>
    %23 = tpu.matmul %22, %7, %cst_16 {dimension_numbers = #tpu.dot_dimension_numbers<[1], [0], [0], [1], [0, 0, 1, 1], [], []>} : vector<304x256xbf16>, vector<256x256xbf16>, vector<304x256xf32> -> vector<304x256xf32>
    %24 = vector.broadcast %10 : vector<1x256xf32> to vector<304x256xf32>
    %25 = arith.addf %23, %24 : vector<304x256xf32>
    %c0_17 = arith.constant 0 : index
    %c0_18 = arith.constant 0 : index
    %26 = vector.load %arg8[%c0_17, %c0_18] : memref<304x256xf32, #tpu.memory_space<vmem>>, vector<304x256xf32>
    tpu.vector_store %arg8[%c0_17, %c0_18], %25 {strides = array<i32>} : memref<304x256xf32, #tpu.memory_space<vmem>>, vector<304x256xf32>,
    return
  }
  func.func @transform_0(%arg0: i32) -> (i32, i32) {
    %c0_i32 = arith.constant 0 : i32
    %c0_i32_0 = arith.constant 0 : i32
    return %arg0, %c0_i32 : i32, i32
  }
  func.func @transform_1(%arg0: i32) -> (i32, i32) {
    %c0_i32 = arith.constant 0 : i32
    %c0_i32_0 = arith.constant 0 : i32
    %c0_i32_1 = arith.constant 0 : i32
    return %c0_i32, %c0_i32_0 : i32, i32
  }
  func.func @transform_2(%arg0: i32) -> (i32, i32) {
    %c0_i32 = arith.constant 0 : i32
    %c0_i32_0 = arith.constant 0 : i32
    %c0_i32_1 = arith.constant 0 : i32
    return %c0_i32, %c0_i32_0 : i32, i32
  }
  func.func @transform_3(%arg0: i32) -> (i32, i32) {
    %c0_i32 = arith.constant 0 : i32
    %c0_i32_0 = arith.constant 0 : i32
    %c0_i32_1 = arith.constant 0 : i32
    return %c0_i32, %c0_i32_0 : i32, i32
  }
  func.func @transform_4(%arg0: i32) -> (i32, i32) {
    %c0_i32 = arith.constant 0 : i32
    %c0_i32_0 = arith.constant 0 : i32
    %c0_i32_1 = arith.constant 0 : i32
    return %c0_i32, %c0_i32_0 : i32, i32
  }
  func.func @transform_5(%arg0: i32) -> (i32, i32) {
    %c0_i32 = arith.constant 0 : i32
    %c0_i32_0 = arith.constant 0 : i32
    %c0_i32_1 = arith.constant 0 : i32
    return %c0_i32, %c0_i32_0 : i32, i32
  }
  func.func @transform_6(%arg0: i32) -> (i32, i32) {
    %c0_i32 = arith.constant 0 : i32
    %c0_i32_0 = arith.constant 0 : i32
    %c0_i32_1 = arith.constant 0 : i32
    return %c0_i32, %c0_i32_0 : i32, i32
  }
  func.func @transform_7(%arg0: i32) -> (i32, i32) {
    %c0_i32 = arith.constant 0 : i32
    %c0_i32_0 = arith.constant 0 : i32
    return %arg0, %c0_i32 : i32, i32
  }
}

</mosaic_0001>

<llo_original>
// kernel: audio_enhancer_forward.1
$region0: #{audio_enhancer_forward.1}
  #allocation0 [shape = 'u32[]', space=smem, size = 0x4, offset = 0x4, fixed_abs, tag = 'smem constant byte address 0x4 - core index']
  #allocation1 [shape = 'u32[144,128]{1,0:T(1,128)}', space=vmem, size = 0x12000, scoped, tag = 'internal scratch']
  %s0 = inlined_call_operand.hbm [shape: f32[300,256], index: 0, kind: input, shape index: {}]
  %s1 = inlined_call_operand.hbm [shape: f32[256,512], index: 1, kind: input, shape index: {}]
  %s2 = inlined_call_operand.vmem [shape: f32[1,512], index: 2, kind: input, shape index: {}]
  %s3 = inlined_call_operand.hbm [shape: f32[512,256], index: 3, kind: input, shape index: {}]
  %s4 = inlined_call_operand.vmem [shape: f32[1,256], index: 4, kind: input, shape index: {}]
  %s5 = inlined_call_operand.hbm [shape: f32[256,256], index: 5, kind: input, shape index: {}]
  %s6 = inlined_call_operand.vmem [shape: f32[1,256], index: 6, kind: input, shape index: {}]
  %s7 = inlined_call_operand.hbm [shape: f32[300,256], index: 7, kind: output, shape index: {}]
  %s8 = sld [smem:[#allocation0]]
  $region54: #{audio_enhancer_forward.1} parent=0
    _
  %s10 = ssub.s32 1, %s8
  %s11 = scalar_select 0, %s10, %s8
  $region1: #{audio_enhancer_forward.1} parent=0
    #allocation2 [shape = 'u8[311296]{0}', space=vmem, size = 0x4c000, scoped, tag = 'input window, operand 0, single buffered']
    #allocation3 [shape = 's32[1]{0}', space=sflag, size = 0x4, scoped, tag = 'scoped memory for audio_enhancer_forward.1']
    #allocation4 [shape = 's32[1]{0}', space=sflag, size = 0x4, scoped, tag = 'scoped memory for audio_enhancer_forward.1']
    #allocation5 [shape = 'u8[524288]{0}', space=vmem, size = 0x80000, scoped, tag = 'input window, operand 1, single buffered']
    #allocation6 [shape = 's32[1]{0}', space=sflag, size = 0x4, scoped, tag = 'scoped memory for audio_enhancer_forward.1']
    #allocation7 [shape = 'u8[524288]{0}', space=vmem, size = 0x80000, scoped, tag = 'input window, operand 3, single buffered']
    #allocation8 [shape = 'u8[262144]{0}', space=vmem, size = 0x40000, scoped, tag = 'input window, operand 5, single buffered']
    #allocation9 [shape = 's32[1]{0}', space=sflag, size = 0x4, scoped, tag = 'scoped memory for audio_enhancer_forward.1']
    #allocation10 [shape = 'u8[311296]{0}', space=vmem, size = 0x4c000, scoped, tag = 'output window, operand 0, single buffered']
    %12 = vsyncpa [#allocation3], 0
    %13 = vsyncpa [#allocation6], 0
    %14 = vsyncpa [#allocation9], 0
    %15 = vsyncpa [#allocation4], 0
    // Predicated region
    $region2: #{audio_enhancer_forward.1} parent=1 // pred_check
      _
    $region3: #{audio_enhancer_forward.1} parent=1 // pred_check_branch
      %17 = sbr.rel (0) target = $region5
    $region4: #{audio_enhancer_forward.1} parent=1 // pred_region
      %s19 = ssub.s32 9728, 9728
      %20 = vsyncadd [#allocation3], %s19
      %s21 = sshll.u32 [#allocation2], 4
      %s22 = int_to_ptr.vmem [resolvable:$true] %s21
      %27 = dma.hbm_to_vmem [thread:$0]  %s0, 9728, %s22, [#allocation3], 256, 256, 16
    $region5: #{audio_enhancer_forward.1} parent=1 // pred_fallthru
      _
    // Predicated region
    $region6: #{audio_enhancer_forward.1} parent=1 // pred_check
      _
    $region7: #{audio_enhancer_forward.1} parent=1 // pred_check_branch
      %29 = sbr.rel (0) target = $region9
    $region8: #{audio_enhancer_forward.1} parent=1 // pred_region
      %s31 = ssub.s32 16384, 16384
      %32 = vsyncadd [#allocation6], %s31
      %s33 = sshll.u32 [#allocation5], 4
      %s34 = int_to_ptr.vmem [resolvable:$true] %s33
      %39 = dma.hbm_to_vmem [thread:$0]  %s1, 16384, %s34, [#allocation6], 512, 512, 32
    $region9: #{audio_enhancer_forward.1} parent=1 // pred_fallthru
      _
    // Predicated region
    $region10: #{audio_enhancer_forward.1} parent=1 // pred_check
      _
    $region11: #{audio_enhancer_forward.1} parent=1 // pred_check_branch
      %41 = sbr.rel (0) target = $region13
    $region12: #{audio_enhancer_forward.1} parent=1 // pred_region
      _
    $region13: #{audio_enhancer_forward.1} parent=1 // pred_fallthru
      _
    // Predicated region
    $region14: #{audio_enhancer_forward.1} parent=1 // pred_check
      _
    $region15: #{audio_enhancer_forward.1} parent=1 // pred_check_branch
      %43 = sbr.rel (0) target = $region17
    $region16: #{audio_enhancer_forward.1} parent=1 // pred_region
      %s45 = ssub.s32 16384, 16384
      %46 = vsyncadd [#allocation6], %s45
      %s47 = sshll.u32 [#allocation7], 4
      %s48 = int_to_ptr.vmem [resolvable:$true] %s47
      %53 = dma.hbm_to_vmem [thread:$0]  %s3, 16384, %s48, [#allocation6], 256, 256, 16
    $region17: #{audio_enhancer_forward.1} parent=1 // pred_fallthru
      _
    // Predicated region
    $region18: #{audio_enhancer_forward.1} parent=1 // pred_check
      _
    $region19: #{audio_enhancer_forward.1} parent=1 // pred_check_branch
      %55 = sbr.rel (0) target = $region21
    $region20: #{audio_enhancer_forward.1} parent=1 // pred_region
      _
    $region21: #{audio_enhancer_forward.1} parent=1 // pred_fallthru
      _
    // Predicated region
    $region22: #{audio_enhancer_forward.1} parent=1 // pred_check
      _
    $region23: #{audio_enhancer_forward.1} parent=1 // pred_check_branch
      %57 = sbr.rel (0) target = $region25
    $region24: #{audio_enhancer_forward.1} parent=1 // pred_region
      %s59 = ssub.s32 8192, 8192
      %60 = vsyncadd [#allocation9], %s59
      %s61 = sshll.u32 [#allocation8], 4
      %s62 = int_to_ptr.vmem [resolvable:$true] %s61
      %67 = dma.hbm_to_vmem [thread:$0]  %s5, 8192, %s62, [#allocation9], 256, 256, 16
    $region25: #{audio_enhancer_forward.1} parent=1 // pred_fallthru
      _
    // Predicated region
    $region26: #{audio_enhancer_forward.1} parent=1 // pred_check
      _
    $region27: #{audio_enhancer_forward.1} parent=1 // pred_check_branch
      %69 = sbr.rel (0) target = $region29
    $region28: #{audio_enhancer_forward.1} parent=1 // pred_region
      _
    $region29: #{audio_enhancer_forward.1} parent=1 // pred_fallthru
      _
    // Predicated region
    $region30: #{audio_enhancer_forward.1} parent=1 // pred_check
      _
    $region31: #{audio_enhancer_forward.1} parent=1 // pred_check_branch
      %71 = sbr.rel (0) target = $region33
    $region32: #{audio_enhancer_forward.1} parent=1 // pred_region
      %72 = dma.done [#allocation3], 9728
    $region33: #{audio_enhancer_forward.1} parent=1 // pred_fallthru
      _
    // Predicated region
    $region34: #{audio_enhancer_forward.1} parent=1 // pred_check
      _
    $region35: #{audio_enhancer_forward.1} parent=1 // pred_check_branch
      %74 = sbr.rel (0) target = $region37
    $region36: #{audio_enhancer_forward.1} parent=1 // pred_region
      %75 = dma.done [#allocation6], 16384
    $region37: #{audio_enhancer_forward.1} parent=1 // pred_fallthru
      _
    // Predicated region
    $region38: #{audio_enhancer_forward.1} parent=1 // pred_check
      _
    $region39: #{audio_enhancer_forward.1} parent=1 // pred_check_branch
      %77 = sbr.rel (0) target = $region41
    $region40: #{audio_enhancer_forward.1} parent=1 // pred_region
      %78 = dma.done [#allocation6], 16384
    $region41: #{audio_enhancer_forward.1} parent=1 // pred_fallthru
      _
    // Predicated region
    $region42: #{audio_enhancer_forward.1} parent=1 // pred_check
      _
    $region43: #{audio_enhancer_forward.1} parent=1 // pred_check_branch
      %80 = sbr.rel (0) target = $region45
    $region44: #{audio_enhancer_forward.1} parent=1 // pred_region
      %81 = dma.done [#allocation9], 8192
    $region45: #{audio_enhancer_forward.1} parent=1 // pred_fallthru
      _
    %v82 = vld [vmem:[#allocation2] sm:$0xff]
    %v83 = vld [vmem:[#allocation2 + $0x8] sm:$0xff]
    %v84 = vld [vmem:[#allocation2 + $0x10] sm:$0xff]
    %v85 = vld [vmem:[#allocation2 + $0x18] sm:$0xff]
    %v86 = vld [vmem:[#allocation2 + $0x20] sm:$0xff]
    %v87 = vld [vmem:[#allocation2 + $0x28] sm:$0xff]
    %v88 = vld [vmem:[#allocation2 + $0x30] sm:$0xff]
    %v89 = vld [vmem:[#allocation2 + $0x38] sm:$0xff]
    %v90 = vld [vmem:[#allocation2 + $0x40] sm:$0xff]
    %v91 = vld [vmem:[#allocation2 + $0x48] sm:$0xff]
    %v92 = vld [vmem:[#allocation2 + $0x50] sm:$0xff]
    %v93 = vld [vmem:[#allocation2 + $0x58] sm:$0xff]
    %v94 = vld [vmem:[#allocation2 + $0x60] sm:$0xff]
    %v95 = vld [vmem:[#allocation2 + $0x68] sm:$0xff]
    %v96 = vld [vmem:[#allocation2 + $0x70] sm:$0xff]
    %v97 = vld [vmem:[#allocation2 + $0x78] sm:$0xff]
    %v98 = vld [vmem:[#allocation2 + $0x80] sm:$0xff]
    %v99 = vld [vmem:[#allocation2 + $0x88] sm:$0xff]
    %v100 = vld [vmem:[#allocation2 + $0x90] sm:$0xff]
    %v101 = vld [vmem:[#allocation2 + $0x98] sm:$0xff]
    %v102 = vld [vmem:[#allocation2 + $0xa0] sm:$0xff]
    %v103 = vld [vmem:[#allocation2 + $0xa8] sm:$0xff]
    %v104 = vld [vmem:[#allocation2 + $0xb0] sm:$0xff]
    %v105 = vld [vmem:[#allocation2 + $0xb8] sm:$0xff]
    %v106 = vld [vmem:[#allocation2 + $0xc0] sm:$0xff]
    %v107 = vld [vmem:[#allocation2 + $0xc8] sm:$0xff]
    %v108 = vld [vmem:[#allocation2 + $0xd0] sm:$0xff]
    %v109 = vld [vmem:[#allocation2 + $0xd8] sm:$0xff]
    %v110 = vld [vmem:[#allocation2 + $0xe0] sm:$0xff]
    %v111 = vld [vmem:[#allocation2 + $0xe8] sm:$0xff]
    %v112 = vld [vmem:[#allocation2 + $0xf0] sm:$0xff]
    %v113 = vld [vmem:[#allocation2 + $0xf8] sm:$0xff]
    %v114 = vld [vmem:[#allocation2 + $0x100] sm:$0xff]
    %v115 = vld [vmem:[#allocation2 + $0x108] sm:$0xff]
    %v116 = vld [vmem:[#allocation2 + $0x110] sm:$0xff]
    %v117 = vld [vmem:[#allocation2 + $0x118] sm:$0xff]
    %v118 = vld [vmem:[#allocation2 + $0x120] sm:$0xff]
    %v119 = vld [vmem:[#allocation2 + $0x128] sm:$0xff]
    %v120 = vld [vmem:[#allocation2 + $0x130] sm:$0xff]
    %v121 = vld [vmem:[#allocation2 + $0x138] sm:$0xff]
    %v122 = vld [vmem:[#allocation2 + $0x140] sm:$0xff]
    %v123 = vld [vmem:[#allocation2 + $0x148] sm:$0xff]
    %v124 = vld [vmem:[#allocation2 + $0x150] sm:$0xff]
    %v125 = vld [vmem:[#allocation2 + $0x158] sm:$0xff]
    %v126 = vld [vmem:[#allocation2 + $0x160] sm:$0xff]
    %v127 = vld [vmem:[#allocation2 + $0x168] sm:$0xff]
    %v128 = vld [vmem:[#allocation2 + $0x170] sm:$0xff]
    %v129 = vld [vmem:[#allocation2 + $0x178] sm:$0xff]
    %v130 = vld [vmem:[#allocation2 + $0x180] sm:$0xff]
    %v131 = vld [vmem:[#allocation2 + $0x188] sm:$0xff]
    %v132 = vld [vmem:[#allocation2 + $0x190] sm:$0xff]
    %v133 = vld [vmem:[#allocation2 + $0x198] sm:$0xff]
    %v134 = vld [vmem:[#allocation2 + $0x1a0] sm:$0xff]
    %v135 = vld [vmem:[#allocation2 + $0x1a8] sm:$0xff]
    %v136 = vld [vmem:[#allocation2 + $0x1b0] sm:$0xff]
    %v137 = vld [vmem:[#allocation2 + $0x1b8] sm:$0xff]
    %v138 = vld [vmem:[#allocation2 + $0x1c0] sm:$0xff]
    %v139 = vld [vmem:[#allocation2 + $0x1c8] sm:$0xff]
    %v140 = vld [vmem:[#allocation2 + $0x1d0] sm:$0xff]
    %v141 = vld [vmem:[#allocation2 + $0x1d8] sm:$0xff]
    %v142 = vld [vmem:[#allocation2 + $0x1e0] sm:$0xff]
    %v143 = vld [vmem:[#allocation2 + $0x1e8] sm:$0xff]
    %v144 = vld [vmem:[#allocation2 + $0x1f0] sm:$0xff]
    %v145 = vld [vmem:[#allocation2 + $0x1f8] sm:$0xff]
    %v146 = vld [vmem:[#allocation2 + $0x200] sm:$0xff]
    %v147 = vld [vmem:[#allocation2 + $0x208] sm:$0xff]
    %v148 = vld [vmem:[#allocation2 + $0x210] sm:$0xff]
    %v149 = vld [vmem:[#allocation2 + $0x218] sm:$0xff]
    %v150 = vld [vmem:[#allocation2 + $0x220] sm:$0xff]
    %v151 = vld [vmem:[#allocation2 + $0x228] sm:$0xff]
    %v152 = vld [vmem:[#allocation2 + $0x230] sm:$0xff]
    %v153 = vld [vmem:[#allocation2 + $0x238] sm:$0xff]
    %v154 = vld [vmem:[#allocation2 + $0x240] sm:$0xff]
    %v155 = vld [vmem:[#allocation2 + $0x248] sm:$0xff]
    %v156 = vld [vmem:[#allocation2 + $0x250] sm:$0xff]
    %v157 = vld [vmem:[#allocation2 + $0x258] sm:$0xff]
    %v158 = vpack.c.bf16 %v84, %v82
    %v159 = vpack.c.bf16 %v85, %v83
    %v160 = vpack.c.bf16 %v88, %v86
    %v161 = vpack.c.bf16 %v89, %v87
    %v162 = vpack.c.bf16 %v92, %v90
    %v163 = vpack.c.bf16 %v93, %v91
    %v164 = vpack.c.bf16 %v96, %v94
    %v165 = vpack.c.bf16 %v97, %v95
    %v166 = vpack.c.bf16 %v100, %v98
    %v167 = vpack.c.bf16 %v101, %v99
    %v168 = vpack.c.bf16 %v104, %v102
    %v169 = vpack.c.bf16 %v105, %v103
    %v170 = vpack.c.bf16 %v108, %v106
    %v171 = vpack.c.bf16 %v109, %v107
    %v172 = vpack.c.bf16 %v112, %v110
    %v173 = vpack.c.bf16 %v113, %v111
    %v174 = vpack.c.bf16 %v116, %v114
    %v175 = vpack.c.bf16 %v117, %v115
    %v176 = vpack.c.bf16 %v120, %v118
    %v177 = vpack.c.bf16 %v121, %v119
    %v178 = vpack.c.bf16 %v124, %v122
    %v179 = vpack.c.bf16 %v125, %v123
    %v180 = vpack.c.bf16 %v128, %v126
    %v181 = vpack.c.bf16 %v129, %v127
    %v182 = vpack.c.bf16 %v132, %v130
    %v183 = vpack.c.bf16 %v133, %v131
    %v184 = vpack.c.bf16 %v136, %v134
    %v185 = vpack.c.bf16 %v137, %v135
    %v186 = vpack.c.bf16 %v140, %v138
    %v187 = vpack.c.bf16 %v141, %v139
    %v188 = vpack.c.bf16 %v144, %v142
    %v189 = vpack.c.bf16 %v145, %v143
    %v190 = vpack.c.bf16 %v148, %v146
    %v191 = vpack.c.bf16 %v149, %v147
    %v192 = vpack.c.bf16 %v152, %v150
    %v193 = vpack.c.bf16 %v153, %v151
    %v194 = vpack.c.bf16 %v156, %v154
    %v195 = vpack.c.bf16 %v157, %v155
    %v196 = vld [vmem:[#allocation5] sm:$0xff]
    %v197 = vld [vmem:[#allocation5 + $0x8] sm:$0xff]
    %v198 = vld [vmem:[#allocation5 + $0x10] sm:$0xff]
    %v199 = vld [vmem:[#allocation5 + $0x18] sm:$0xff]
    %v200 = vld [vmem:[#allocation5 + $0x20] sm:$0xff]
    %v201 = vld [vmem:[#allocation5 + $0x28] sm:$0xff]
    %v202 = vld [vmem:[#allocation5 + $0x30] sm:$0xff]
    %v203 = vld [vmem:[#allocation5 + $0x38] sm:$0xff]
    %v204 = vld [vmem:[#allocation5 + $0x40] sm:$0xff]
    %v205 = vld [vmem:[#allocation5 + $0x48] sm:$0xff]
    %v206 = vld [vmem:[#allocation5 + $0x50] sm:$0xff]
    %v207 = vld [vmem:[#allocation5 + $0x58] sm:$0xff]
    %v208 = vld [vmem:[#allocation5 + $0x60] sm:$0xff]
    %v209 = vld [vmem:[#allocation5 + $0x68] sm:$0xff]
    %v210 = vld [vmem:[#allocation5 + $0x70] sm:$0xff]
    %v211 = vld [vmem:[#allocation5 + $0x78] sm:$0xff]
    %v212 = vld [vmem:[#allocation5 + $0x80] sm:$0xff]
    %v213 = vld [vmem:[#allocation5 + $0x88] sm:$0xff]
    %v214 = vld [vmem:[#allocation5 + $0x90] sm:$0xff]
    %v215 = vld [vmem:[#allocation5 + $0x98] sm:$0xff]
    %v216 = vld [vmem:[#allocation5 + $0xa0] sm:$0xff]
    %v217 = vld [vmem:[#allocation5 + $0xa8] sm:$0xff]
    %v218 = vld [vmem:[#allocation5 + $0xb0] sm:$0xff]
    %v219 = vld [vmem:[#allocation5 + $0xb8] sm:$0xff]
    %v220 = vld [vmem:[#allocation5 + $0xc0] sm:$0xff]
    %v221 = vld [vmem:[#allocation5 + $0xc8] sm:$0xff]
    %v222 = vld [vmem:[#allocation5 + $0xd0] sm:$0xff]
    %v223 = vld [vmem:[#allocation5 + $0xd8] sm:$0xff]
    %v224 = vld [vmem:[#allocation5 + $0xe0] sm:$0xff]
    %v225 = vld [vmem:[#allocation5 + $0xe8] sm:$0xff]
    %v226 = vld [vmem:[#allocation5 + $0xf0] sm:$0xff]
    %v227 = vld [vmem:[#allocation5 + $0xf8] sm:$0xff]
    %v228 = vld [vmem:[#allocation5 + $0x100] sm:$0xff]
    %v229 = vld [vmem:[#allocation5 + $0x108] sm:$0xff]
    %v230 = vld [vmem:[#allocation5 + $0x110] sm:$0xff]
    %v231 = vld [vmem:[#allocation5 + $0x118] sm:$0xff]
    %v232 = vld [vmem:[#allocation5 + $0x120] sm:$0xff]
    %v233 = vld [vmem:[#allocation5 + $0x128] sm:$0xff]
    %v234 = vld [vmem:[#allocation5 + $0x130] sm:$0xff]
    %v235 = vld [vmem:[#allocation5 + $0x138] sm:$0xff]
    %v236 = vld [vmem:[#allocation5 + $0x140] sm:$0xff]
    %v237 = vld [vmem:[#allocation5 + $0x148] sm:$0xff]
    %v238 = vld [vmem:[#allocation5 + $0x150] sm:$0xff]
    %v239 = vld [vmem:[#allocation5 + $0x158] sm:$0xff]
    %v240 = vld [vmem:[#allocation5 + $0x160] sm:$0xff]
    %v241 = vld [vmem:[#allocation5 + $0x168] sm:$0xff]
    %v242 = vld [vmem:[#allocation5 + $0x170] sm:$0xff]
    %v243 = vld [vmem:[#allocation5 + $0x178] sm:$0xff]
    %v244 = vld [vmem:[#allocation5 + $0x180] sm:$0xff]
    %v245 = vld [vmem:[#allocation5 + $0x188] sm:$0xff]
    %v246 = vld [vmem:[#allocation5 + $0x190] sm:$0xff]
    %v247 = vld [vmem:[#allocation5 + $0x198] sm:$0xff]
    %v248 = vld [vmem:[#allocation5 + $0x1a0] sm:$0xff]
    %v249 = vld [vmem:[#allocation5 + $0x1a8] sm:$0xff]
    %v250 = vld [vmem:[#allocation5 + $0x1b0] sm:$0xff]
    %v251 = vld [vmem:[#allocation5 + $0x1b8] sm:$0xff]
    %v252 = vld [vmem:[#allocation5 + $0x1c0] sm:$0xff]
    %v253 = vld [vmem:[#allocation5 + $0x1c8] sm:$0xff]
    %v254 = vld [vmem:[#allocation5 + $0x1d0] sm:$0xff]
    %v255 = vld [vmem:[#allocation5 + $0x1d8] sm:$0xff]
    %v256 = vld [vmem:[#allocation5 + $0x1e0] sm:$0xff]
    %v257 = vld [vmem:[#allocation5 + $0x1e8] sm:$0xff]
    %v258 = vld [vmem:[#allocation5 + $0x1f0] sm:$0xff]
    %v259 = vld [vmem:[#allocation5 + $0x1f8] sm:$0xff]
    %v260 = vld [vmem:[#allocation5 + $0x200] sm:$0xff]
    %v261 = vld [vmem:[#allocation5 + $0x208] sm:$0xff]
    %v262 = vld [vmem:[#allocation5 + $0x210] sm:$0xff]
    %v263 = vld [vmem:[#allocation5 + $0x218] sm:$0xff]
    %v264 = vld [vmem:[#allocation5 + $0x220] sm:$0xff]
    %v265 = vld [vmem:[#allocation5 + $0x228] sm:$0xff]
    %v266 = vld [vmem:[#allocation5 + $0x230] sm:$0xff]
    %v267 = vld [vmem:[#allocation5 + $0x238] sm:$0xff]
    %v268 = vld [vmem:[#allocation5 + $0x240] sm:$0xff]
    %v269 = vld [vmem:[#allocation5 + $0x248] sm:$0xff]
    %v270 = vld [vmem:[#allocation5 + $0x250] sm:$0xff]
    %v271 = vld [vmem:[#allocation5 + $0x258] sm:$0xff]
    %v272 = vld [vmem:[#allocation5 + $0x260] sm:$0xff]
    %v273 = vld [vmem:[#allocation5 + $0x268] sm:$0xff]
    %v274 = vld [vmem:[#allocation5 + $0x270] sm:$0xff]
    %v275 = vld [vmem:[#allocation5 + $0x278] sm:$0xff]
    %v276 = vld [vmem:[#allocation5 + $0x280] sm:$0xff]
    %v277 = vld [vmem:[#allocation5 + $0x288] sm:$0xff]
    %v278 = vld [vmem:[#allocation5 + $0x290] sm:$0xff]
    %v279 = vld [vmem:[#allocation5 + $0x298] sm:$0xff]
    %v280 = vld [vmem:[#allocation5 + $0x2a0] sm:$0xff]
    %v281 = vld [vmem:[#allocation5 + $0x2a8] sm:$0xff]
    %v282 = vld [vmem:[#allocation5 + $0x2b0] sm:$0xff]
    %v283 = vld [vmem:[#allocation5 + $0x2b8] sm:$0xff]
    %v284 = vld [vmem:[#allocation5 + $0x2c0] sm:$0xff]
    %v285 = vld [vmem:[#allocation5 + $0x2c8] sm:$0xff]
    %v286 = vld [vmem:[#allocation5 + $0x2d0] sm:$0xff]
    %v287 = vld [vmem:[#allocation5 + $0x2d8] sm:$0xff]
    %v288 = vld [vmem:[#allocation5 + $0x2e0] sm:$0xff]
    %v289 = vld [vmem:[#allocation5 + $0x2e8] sm:$0xff]
    %v290 = vld [vmem:[#allocation5 + $0x2f0] sm:$0xff]
    %v291 = vld [vmem:[#allocation5 + $0x2f8] sm:$0xff]
    %v292 = vld [vmem:[#allocation5 + $0x300] sm:$0xff]
    %v293 = vld [vmem:[#allocation5 + $0x308] sm:$0xff]
    %v294 = vld [vmem:[#allocation5 + $0x310] sm:$0xff]
    %v295 = vld [vmem:[#allocation5 + $0x318] sm:$0xff]
    %v296 = vld [vmem:[#allocation5 + $0x320] sm:$0xff]
    %v297 = vld [vmem:[#allocation5 + $0x328] sm:$0xff]
    %v298 = vld [vmem:[#allocation5 + $0x330] sm:$0xff]
    %v299 = vld [vmem:[#allocation5 + $0x338] sm:$0xff]
    %v300 = vld [vmem:[#allocation5 + $0x340] sm:$0xff]
    %v301 = vld [vmem:[#allocation5 + $0x348] sm:$0xff]
    %v302 = vld [vmem:[#allocation5 + $0x350] sm:$0xff]
    %v303 = vld [vmem:[#allocation5 + $0x358] sm:$0xff]
    %v304 = vld [vmem:[#allocation5 + $0x360] sm:$0xff]
    %v305 = vld [vmem:[#allocation5 + $0x368] sm:$0xff]
    %v306 = vld [vmem:[#allocation5 + $0x370] sm:$0xff]
    %v307 = vld [vmem:[#allocation5 + $0x378] sm:$0xff]
    %v308 = vld [vmem:[#allocation5 + $0x380] sm:$0xff]
    %v309 = vld [vmem:[#allocation5 + $0x388] sm:$0xff]
    %v310 = vld [vmem:[#allocation5 + $0x390] sm:$0xff]
    %v311 = vld [vmem:[#allocation5 + $0x398] sm:$0xff]
    %v312 = vld [vmem:[#allocation5 + $0x3a0] sm:$0xff]
    %v313 = vld [vmem:[#allocation5 + $0x3a8] sm:$0xff]
    %v314 = vld [vmem:[#allocation5 + $0x3b0] sm:$0xff]
    %v315 = vld [vmem:[#allocation5 + $0x3b8] sm:$0xff]
    %v316 = vld [vmem:[#allocation5 + $0x3c0] sm:$0xff]
    %v317 = vld [vmem:[#allocation5 + $0x3c8] sm:$0xff]
    %v318 = vld [vmem:[#allocation5 + $0x3d0] sm:$0xff]
    %v319 = vld [vmem:[#allocation5 + $0x3d8] sm:$0xff]
    %v320 = vld [vmem:[#allocation5 + $0x3e0] sm:$0xff]
    %v321 = vld [vmem:[#allocation5 + $0x3e8] sm:$0xff]
    %v322 = vld [vmem:[#allocation5 + $0x3f0] sm:$0xff]
    %v323 = vld [vmem:[#allocation5 + $0x3f8] sm:$0xff]
    %v324 = vpack.c.bf16 %v200, %v196
    %v325 = vpack.c.bf16 %v201, %v197
    %v326 = vpack.c.bf16 %v202, %v198
    %v327 = vpack.c.bf16 %v203, %v199
    %v328 = vpack.c.bf16 %v208, %v204
    %v329 = vpack.c.bf16 %v209, %v205
    %v330 = vpack.c.bf16 %v210, %v206
    %v331 = vpack.c.bf16 %v211, %v207
    %v332 = vpack.c.bf16 %v216, %v212
    %v333 = vpack.c.bf16 %v217, %v213
    %v334 = vpack.c.bf16 %v218, %v214
    %v335 = vpack.c.bf16 %v219, %v215
    %v336 = vpack.c.bf16 %v224, %v220
    %v337 = vpack.c.bf16 %v225, %v221
    %v338 = vpack.c.bf16 %v226, %v222
    %v339 = vpack.c.bf16 %v227, %v223
    %v340 = vpack.c.bf16 %v232, %v228
    %v341 = vpack.c.bf16 %v233, %v229
    %v342 = vpack.c.bf16 %v234, %v230
    %v343 = vpack.c.bf16 %v235, %v231
    %v344 = vpack.c.bf16 %v240, %v236
    %v345 = vpack.c.bf16 %v241, %v237
    %v346 = vpack.c.bf16 %v242, %v238
    %v347 = vpack.c.bf16 %v243, %v239
    %v348 = vpack.c.bf16 %v248, %v244
    %v349 = vpack.c.bf16 %v249, %v245
    %v350 = vpack.c.bf16 %v250, %v246
    %v351 = vpack.c.bf16 %v251, %v247
    %v352 = vpack.c.bf16 %v256, %v252
    %v353 = vpack.c.bf16 %v257, %v253
    %v354 = vpack.c.bf16 %v258, %v254
    %v355 = vpack.c.bf16 %v259, %v255
    %v356 = vpack.c.bf16 %v264, %v260
    %v357 = vpack.c.bf16 %v265, %v261
    %v358 = vpack.c.bf16 %v266, %v262
    %v359 = vpack.c.bf16 %v267, %v263
    %v360 = vpack.c.bf16 %v272, %v268
    %v361 = vpack.c.bf16 %v273, %v269
    %v362 = vpack.c.bf16 %v274, %v270
    %v363 = vpack.c.bf16 %v275, %v271
    %v364 = vpack.c.bf16 %v280, %v276
    %v365 = vpack.c.bf16 %v281, %v277
    %v366 = vpack.c.bf16 %v282, %v278
    %v367 = vpack.c.bf16 %v283, %v279
    %v368 = vpack.c.bf16 %v288, %v284
    %v369 = vpack.c.bf16 %v289, %v285
    %v370 = vpack.c.bf16 %v290, %v286
    %v371 = vpack.c.bf16 %v291, %v287
    %v372 = vpack.c.bf16 %v296, %v292
    %v373 = vpack.c.bf16 %v297, %v293
    %v374 = vpack.c.bf16 %v298, %v294
    %v375 = vpack.c.bf16 %v299, %v295
    %v376 = vpack.c.bf16 %v304, %v300
    %v377 = vpack.c.bf16 %v305, %v301
    %v378 = vpack.c.bf16 %v306, %v302
    %v379 = vpack.c.bf16 %v307, %v303
    %v380 = vpack.c.bf16 %v312, %v308
    %v381 = vpack.c.bf16 %v313, %v309
    %v382 = vpack.c.bf16 %v314, %v310
    %v383 = vpack.c.bf16 %v315, %v311
    %v384 = vpack.c.bf16 %v320, %v316
    %v385 = vpack.c.bf16 %v321, %v317
    %v386 = vpack.c.bf16 %v322, %v318
    %v387 = vpack.c.bf16 %v323, %v319
    %v388 = vld [vmem:[#allocation7] sm:$0xff]
    %v389 = vld [vmem:[#allocation7 + $0x8] sm:$0xff]
    %v390 = vld [vmem:[#allocation7 + $0x10] sm:$0xff]
    %v391 = vld [vmem:[#allocation7 + $0x18] sm:$0xff]
    %v392 = vld [vmem:[#allocation7 + $0x20] sm:$0xff]
    %v393 = vld [vmem:[#allocation7 + $0x28] sm:$0xff]
    %v394 = vld [vmem:[#allocation7 + $0x30] sm:$0xff]
    %v395 = vld [vmem:[#allocation7 + $0x38] sm:$0xff]
    %v396 = vld [vmem:[#allocation7 + $0x40] sm:$0xff]
    %v397 = vld [vmem:[#allocation7 + $0x48] sm:$0xff]
    %v398 = vld [vmem:[#allocation7 + $0x50] sm:$0xff]
    %v399 = vld [vmem:[#allocation7 + $0x58] sm:$0xff]
    %v400 = vld [vmem:[#allocation7 + $0x60] sm:$0xff]
    %v401 = vld [vmem:[#allocation7 + $0x68] sm:$0xff]
    %v402 = vld [vmem:[#allocation7 + $0x70] sm:$0xff]
    %v403 = vld [vmem:[#allocation7 + $0x78] sm:$0xff]
    %v404 = vld [vmem:[#allocation7 + $0x80] sm:$0xff]
    %v405 = vld [vmem:[#allocation7 + $0x88] sm:$0xff]
    %v406 = vld [vmem:[#allocation7 + $0x90] sm:$0xff]
    %v407 = vld [vmem:[#allocation7 + $0x98] sm:$0xff]
    %v408 = vld [vmem:[#allocation7 + $0xa0] sm:$0xff]
    %v409 = vld [vmem:[#allocation7 + $0xa8] sm:$0xff]
    %v410 = vld [vmem:[#allocation7 + $0xb0] sm:$0xff]
    %v411 = vld [vmem:[#allocation7 + $0xb8] sm:$0xff]
    %v412 = vld [vmem:[#allocation7 + $0xc0] sm:$0xff]
    %v413 = vld [vmem:[#allocation7 + $0xc8] sm:$0xff]
    %v414 = vld [vmem:[#allocation7 + $0xd0] sm:$0xff]
    %v415 = vld [vmem:[#allocation7 + $0xd8] sm:$0xff]
    %v416 = vld [vmem:[#allocation7 + $0xe0] sm:$0xff]
    %v417 = vld [vmem:[#allocation7 + $0xe8] sm:$0xff]
    %v418 = vld [vmem:[#allocation7 + $0xf0] sm:$0xff]
    %v419 = vld [vmem:[#allocation7 + $0xf8] sm:$0xff]
    %v420 = vld [vmem:[#allocation7 + $0x100] sm:$0xff]
    %v421 = vld [vmem:[#allocation7 + $0x108] sm:$0xff]
    %v422 = vld [vmem:[#allocation7 + $0x110] sm:$0xff]
    %v423 = vld [vmem:[#allocation7 + $0x118] sm:$0xff]
    %v424 = vld [vmem:[#allocation7 + $0x120] sm:$0xff]
    %v425 = vld [vmem:[#allocation7 + $0x128] sm:$0xff]
    %v426 = vld [vmem:[#allocation7 + $0x130] sm:$0xff]
    %v427 = vld [vmem:[#allocation7 + $0x138] sm:$0xff]
    %v428 = vld [vmem:[#allocation7 + $0x140] sm:$0xff]
    %v429 = vld [vmem:[#allocation7 + $0x148] sm:$0xff]
    %v430 = vld [vmem:[#allocation7 + $0x150] sm:$0xff]
    %v431 = vld [vmem:[#allocation7 + $0x158] sm:$0xff]
    %v432 = vld [vmem:[#allocation7 + $0x160] sm:$0xff]
    %v433 = vld [vmem:[#allocation7 + $0x168] sm:$0xff]
    %v434 = vld [vmem:[#allocation7 + $0x170] sm:$0xff]
    %v435 = vld [vmem:[#allocation7 + $0x178] sm:$0xff]
    %v436 = vld [vmem:[#allocation7 + $0x180] sm:$0xff]
    %v437 = vld [vmem:[#allocation7 + $0x188] sm:$0xff]
    %v438 = vld [vmem:[#allocation7 + $0x190] sm:$0xff]
    %v439 = vld [vmem:[#allocation7 + $0x198] sm:$0xff]
    %v440 = vld [vmem:[#allocation7 + $0x1a0] sm:$0xff]
    %v441 = vld [vmem:[#allocation7 + $0x1a8] sm:$0xff]
    %v442 = vld [vmem:[#allocation7 + $0x1b0] sm:$0xff]
    %v443 = vld [vmem:[#allocation7 + $0x1b8] sm:$0xff]
    %v444 = vld [vmem:[#allocation7 + $0x1c0] sm:$0xff]
    %v445 = vld [vmem:[#allocation7 + $0x1c8] sm:$0xff]
    %v446 = vld [vmem:[#allocation7 + $0x1d0] sm:$0xff]
    %v447 = vld [vmem:[#allocation7 + $0x1d8] sm:$0xff]
    %v448 = vld [vmem:[#allocation7 + $0x1e0] sm:$0xff]
    %v449 = vld [vmem:[#allocation7 + $0x1e8] sm:$0xff]
    %v450 = vld [vmem:[#allocation7 + $0x1f0] sm:$0xff]
    %v451 = vld [vmem:[#allocation7 + $0x1f8] sm:$0xff]
    %v452 = vld [vmem:[#allocation7 + $0x200] sm:$0xff]
    %v453 = vld [vmem:[#allocation7 + $0x208] sm:$0xff]
    %v454 = vld [vmem:[#allocation7 + $0x210] sm:$0xff]
    %v455 = vld [vmem:[#allocation7 + $0x218] sm:$0xff]
    %v456 = vld [vmem:[#allocation7 + $0x220] sm:$0xff]
    %v457 = vld [vmem:[#allocation7 + $0x228] sm:$0xff]
    %v458 = vld [vmem:[#allocation7 + $0x230] sm:$0xff]
    %v459 = vld [vmem:[#allocation7 + $0x238] sm:$0xff]
    %v460 = vld [vmem:[#allocation7 + $0x240] sm:$0xff]
    %v461 = vld [vmem:[#allocation7 + $0x248] sm:$0xff]
    %v462 = vld [vmem:[#allocation7 + $0x250] sm:$0xff]
    %v463 = vld [vmem:[#allocation7 + $0x258] sm:$0xff]
    %v464 = vld [vmem:[#allocation7 + $0x260] sm:$0xff]
    %v465 = vld [vmem:[#allocation7 + $0x268] sm:$0xff]
    %v466 = vld [vmem:[#allocation7 + $0x270] sm:$0xff]
    %v467 = vld [vmem:[#allocation7 + $0x278] sm:$0xff]
    %v468 = vld [vmem:[#allocation7 + $0x280] sm:$0xff]
    %v469 = vld [vmem:[#allocation7 + $0x288] sm:$0xff]
    %v470 = vld [vmem:[#allocation7 + $0x290] sm:$0xff]
    %v471 = vld [vmem:[#allocation7 + $0x298] sm:$0xff]
    %v472 = vld [vmem:[#allocation7 + $0x2a0] sm:$0xff]
    %v473 = vld [vmem:[#allocation7 + $0x2a8] sm:$0xff]
    %v474 = vld [vmem:[#allocation7 + $0x2b0] sm:$0xff]
    %v475 = vld [vmem:[#allocation7 + $0x2b8] sm:$0xff]
    %v476 = vld [vmem:[#allocation7 + $0x2c0] sm:$0xff]
    %v477 = vld [vmem:[#allocation7 + $0x2c8] sm:$0xff]
    %v478 = vld [vmem:[#allocation7 + $0x2d0] sm:$0xff]
    %v479 = vld [vmem:[#allocation7 + $0x2d8] sm:$0xff]
    %v480 = vld [vmem:[#allocation7 + $0x2e0] sm:$0xff]
    %v481 = vld [vmem:[#allocation7 + $0x2e8] sm:$0xff]
    %v482 = vld [vmem:[#allocation7 + $0x2f0] sm:$0xff]
    %v483 = vld [vmem:[#allocation7 + $0x2f8] sm:$0xff]
    %v484 = vld [vmem:[#allocation7 + $0x300] sm:$0xff]
    %v485 = vld [vmem:[#allocation7 + $0x308] sm:$0xff]
    %v486 = vld [vmem:[#allocation7 + $0x310] sm:$0xff]
    %v487 = vld [vmem:[#allocation7 + $0x318] sm:$0xff]
    %v488 = vld [vmem:[#allocation7 + $0x320] sm:$0xff]
    %v489 = vld [vmem:[#allocation7 + $0x328] sm:$0xff]
    %v490 = vld [vmem:[#allocation7 + $0x330] sm:$0xff]
    %v491 = vld [vmem:[#allocation7 + $0x338] sm:$0xff]
    %v492 = vld [vmem:[#allocation7 + $0x340] sm:$0xff]
    %v493 = vld [vmem:[#allocation7 + $0x348] sm:$0xff]
    %v494 = vld [vmem:[#allocation7 + $0x350] sm:$0xff]
    %v495 = vld [vmem:[#allocation7 + $0x358] sm:$0xff]
    %v496 = vld [vmem:[#allocation7 + $0x360] sm:$0xff]
    %v497 = vld [vmem:[#allocation7 + $0x368] sm:$0xff]
    %v498 = vld [vmem:[#allocation7 + $0x370] sm:$0xff]
    %v499 = vld [vmem:[#allocation7 + $0x378] sm:$0xff]
    %v500 = vld [vmem:[#allocation7 + $0x380] sm:$0xff]
    %v501 = vld [vmem:[#allocation7 + $0x388] sm:$0xff]
    %v502 = vld [vmem:[#allocation7 + $0x390] sm:$0xff]
    %v503 = vld [vmem:[#allocation7 + $0x398] sm:$0xff]
    %v504 = vld [vmem:[#allocation7 + $0x3a0] sm:$0xff]
    %v505 = vld [vmem:[#allocation7 + $0x3a8] sm:$0xff]
    %v506 = vld [vmem:[#allocation7 + $0x3b0] sm:$0xff]
    %v507 = vld [vmem:[#allocation7 + $0x3b8] sm:$0xff]
    %v508 = vld [vmem:[#allocation7 + $0x3c0] sm:$0xff]
    %v509 = vld [vmem:[#allocation7 + $0x3c8] sm:$0xff]
    %v510 = vld [vmem:[#allocation7 + $0x3d0] sm:$0xff]
    %v511 = vld [vmem:[#allocation7 + $0x3d8] sm:$0xff]
    %v512 = vld [vmem:[#allocation7 + $0x3e0] sm:$0xff]
    %v513 = vld [vmem:[#allocation7 + $0x3e8] sm:$0xff]
    %v514 = vld [vmem:[#allocation7 + $0x3f0] sm:$0xff]
    %v515 = vld [vmem:[#allocation7 + $0x3f8] sm:$0xff]
    %v516 = vpack.c.bf16 %v390, %v388
    %v517 = vpack.c.bf16 %v391, %v389
    %v518 = vpack.c.bf16 %v394, %v392
    %v519 = vpack.c.bf16 %v395, %v393
    %v520 = vpack.c.bf16 %v398, %v396
    %v521 = vpack.c.bf16 %v399, %v397
    %v522 = vpack.c.bf16 %v402, %v400
    %v523 = vpack.c.bf16 %v403, %v401
    %v524 = vpack.c.bf16 %v406, %v404
    %v525 = vpack.c.bf16 %v407, %v405
    %v526 = vpack.c.bf16 %v410, %v408
    %v527 = vpack.c.bf16 %v411, %v409
    %v528 = vpack.c.bf16 %v414, %v412
    %v529 = vpack.c.bf16 %v415, %v413
    %v530 = vpack.c.bf16 %v418, %v416
    %v531 = vpack.c.bf16 %v419, %v417
    %v532 = vpack.c.bf16 %v422, %v420
    %v533 = vpack.c.bf16 %v423, %v421
    %v534 = vpack.c.bf16 %v426, %v424
    %v535 = vpack.c.bf16 %v427, %v425
    %v536 = vpack.c.bf16 %v430, %v428
    %v537 = vpack.c.bf16 %v431, %v429
    %v538 = vpack.c.bf16 %v434, %v432
    %v539 = vpack.c.bf16 %v435, %v433
    %v540 = vpack.c.bf16 %v438, %v436
    %v541 = vpack.c.bf16 %v439, %v437
    %v542 = vpack.c.bf16 %v442, %v440
    %v543 = vpack.c.bf16 %v443, %v441
    %v544 = vpack.c.bf16 %v446, %v444
    %v545 = vpack.c.bf16 %v447, %v445
    %v546 = vpack.c.bf16 %v450, %v448
    %v547 = vpack.c.bf16 %v451, %v449
    %v548 = vpack.c.bf16 %v454, %v452
    %v549 = vpack.c.bf16 %v455, %v453
    %v550 = vpack.c.bf16 %v458, %v456
    %v551 = vpack.c.bf16 %v459, %v457
    %v552 = vpack.c.bf16 %v462, %v460
    %v553 = vpack.c.bf16 %v463, %v461
    %v554 = vpack.c.bf16 %v466, %v464
    %v555 = vpack.c.bf16 %v467, %v465
    %v556 = vpack.c.bf16 %v470, %v468
    %v557 = vpack.c.bf16 %v471, %v469
    %v558 = vpack.c.bf16 %v474, %v472
    %v559 = vpack.c.bf16 %v475, %v473
    %v560 = vpack.c.bf16 %v478, %v476
    %v561 = vpack.c.bf16 %v479, %v477
    %v562 = vpack.c.bf16 %v482, %v480
    %v563 = vpack.c.bf16 %v483, %v481
    %v564 = vpack.c.bf16 %v486, %v484
    %v565 = vpack.c.bf16 %v487, %v485
    %v566 = vpack.c.bf16 %v490, %v488
    %v567 = vpack.c.bf16 %v491, %v489
    %v568 = vpack.c.bf16 %v494, %v492
    %v569 = vpack.c.bf16 %v495, %v493
    %v570 = vpack.c.bf16 %v498, %v496
    %v571 = vpack.c.bf16 %v499, %v497
    %v572 = vpack.c.bf16 %v502, %v500
    %v573 = vpack.c.bf16 %v503, %v501
    %v574 = vpack.c.bf16 %v506, %v504
    %v575 = vpack.c.bf16 %v507, %v505
    %v576 = vpack.c.bf16 %v510, %v508
    %v577 = vpack.c.bf16 %v511, %v509
    %v578 = vpack.c.bf16 %v514, %v512
    %v579 = vpack.c.bf16 %v515, %v513
    %v580 = vld [vmem:[#allocation8] sm:$0xff]
    %v581 = vld [vmem:[#allocation8 + $0x8] sm:$0xff]
    %v582 = vld [vmem:[#allocation8 + $0x10] sm:$0xff]
    %v583 = vld [vmem:[#allocation8 + $0x18] sm:$0xff]
    %v584 = vld [vmem:[#allocation8 + $0x20] sm:$0xff]
    %v585 = vld [vmem:[#allocation8 + $0x28] sm:$0xff]
    %v586 = vld [vmem:[#allocation8 + $0x30] sm:$0xff]
    %v587 = vld [vmem:[#allocation8 + $0x38] sm:$0xff]
    %v588 = vld [vmem:[#allocation8 + $0x40] sm:$0xff]
    %v589 = vld [vmem:[#allocation8 + $0x48] sm:$0xff]
    %v590 = vld [vmem:[#allocation8 + $0x50] sm:$0xff]
    %v591 = vld [vmem:[#allocation8 + $0x58] sm:$0xff]
    %v592 = vld [vmem:[#allocation8 + $0x60] sm:$0xff]
    %v593 = vld [vmem:[#allocation8 + $0x68] sm:$0xff]
    %v594 = vld [vmem:[#allocation8 + $0x70] sm:$0xff]
    %v595 = vld [vmem:[#allocation8 + $0x78] sm:$0xff]
    %v596 = vld [vmem:[#allocation8 + $0x80] sm:$0xff]
    %v597 = vld [vmem:[#allocation8 + $0x88] sm:$0xff]
    %v598 = vld [vmem:[#allocation8 + $0x90] sm:$0xff]
    %v599 = vld [vmem:[#allocation8 + $0x98] sm:$0xff]
    %v600 = vld [vmem:[#allocation8 + $0xa0] sm:$0xff]
    %v601 = vld [vmem:[#allocation8 + $0xa8] sm:$0xff]
    %v602 = vld [vmem:[#allocation8 + $0xb0] sm:$0xff]
    %v603 = vld [vmem:[#allocation8 + $0xb8] sm:$0xff]
    %v604 = vld [vmem:[#allocation8 + $0xc0] sm:$0xff]
    %v605 = vld [vmem:[#allocation8 + $0xc8] sm:$0xff]
    %v606 = vld [vmem:[#allocation8 + $0xd0] sm:$0xff]
    %v607 = vld [vmem:[#allocation8 + $0xd8] sm:$0xff]
    %v608 = vld [vmem:[#allocation8 + $0xe0] sm:$0xff]
    %v609 = vld [vmem:[#allocation8 + $0xe8] sm:$0xff]
    %v610 = vld [vmem:[#allocation8 + $0xf0] sm:$0xff]
    %v611 = vld [vmem:[#allocation8 + $0xf8] sm:$0xff]
    %v612 = vld [vmem:[#allocation8 + $0x100] sm:$0xff]
    %v613 = vld [vmem:[#allocation8 + $0x108] sm:$0xff]
    %v614 = vld [vmem:[#allocation8 + $0x110] sm:$0xff]
    %v615 = vld [vmem:[#allocation8 + $0x118] sm:$0xff]
    %v616 = vld [vmem:[#allocation8 + $0x120] sm:$0xff]
    %v617 = vld [vmem:[#allocation8 + $0x128] sm:$0xff]
    %v618 = vld [vmem:[#allocation8 + $0x130] sm:$0xff]
    %v619 = vld [vmem:[#allocation8 + $0x138] sm:$0xff]
    %v620 = vld [vmem:[#allocation8 + $0x140] sm:$0xff]
    %v621 = vld [vmem:[#allocation8 + $0x148] sm:$0xff]
    %v622 = vld [vmem:[#allocation8 + $0x150] sm:$0xff]
    %v623 = vld [vmem:[#allocation8 + $0x158] sm:$0xff]
    %v624 = vld [vmem:[#allocation8 + $0x160] sm:$0xff]
    %v625 = vld [vmem:[#allocation8 + $0x168] sm:$0xff]
    %v626 = vld [vmem:[#allocation8 + $0x170] sm:$0xff]
    %v627 = vld [vmem:[#allocation8 + $0x178] sm:$0xff]
    %v628 = vld [vmem:[#allocation8 + $0x180] sm:$0xff]
    %v629 = vld [vmem:[#allocation8 + $0x188] sm:$0xff]
    %v630 = vld [vmem:[#allocation8 + $0x190] sm:$0xff]
    %v631 = vld [vmem:[#allocation8 + $0x198] sm:$0xff]
    %v632 = vld [vmem:[#allocation8 + $0x1a0] sm:$0xff]
    %v633 = vld [vmem:[#allocation8 + $0x1a8] sm:$0xff]
    %v634 = vld [vmem:[#allocation8 + $0x1b0] sm:$0xff]
    %v635 = vld [vmem:[#allocation8 + $0x1b8] sm:$0xff]
    %v636 = vld [vmem:[#allocation8 + $0x1c0] sm:$0xff]
    %v637 = vld [vmem:[#allocation8 + $0x1c8] sm:$0xff]
    %v638 = vld [vmem:[#allocation8 + $0x1d0] sm:$0xff]
    %v639 = vld [vmem:[#allocation8 + $0x1d8] sm:$0xff]
    %v640 = vld [vmem:[#allocation8 + $0x1e0] sm:$0xff]
    %v641 = vld [vmem:[#allocation8 + $0x1e8] sm:$0xff]
    %v642 = vld [vmem:[#allocation8 + $0x1f0] sm:$0xff]
    %v643 = vld [vmem:[#allocation8 + $0x1f8] sm:$0xff]
    %v644 = vpack.c.bf16 %v582, %v580
    %v645 = vpack.c.bf16 %v583, %v581
    %v646 = vpack.c.bf16 %v586, %v584
    %v647 = vpack.c.bf16 %v587, %v585
    %v648 = vpack.c.bf16 %v590, %v588
    %v649 = vpack.c.bf16 %v591, %v589
    %v650 = vpack.c.bf16 %v594, %v592
    %v651 = vpack.c.bf16 %v595, %v593
    %v652 = vpack.c.bf16 %v598, %v596
    %v653 = vpack.c.bf16 %v599, %v597
    %v654 = vpack.c.bf16 %v602, %v600
    %v655 = vpack.c.bf16 %v603, %v601
    %v656 = vpack.c.bf16 %v606, %v604
    %v657 = vpack.c.bf16 %v607, %v605
    %v658 = vpack.c.bf16 %v610, %v608
    %v659 = vpack.c.bf16 %v611, %v609
    %v660 = vpack.c.bf16 %v614, %v612
    %v661 = vpack.c.bf16 %v615, %v613
    %v662 = vpack.c.bf16 %v618, %v616
    %v663 = vpack.c.bf16 %v619, %v617
    %v664 = vpack.c.bf16 %v622, %v620
    %v665 = vpack.c.bf16 %v623, %v621
    %v666 = vpack.c.bf16 %v626, %v624
    %v667 = vpack.c.bf16 %v627, %v625
    %v668 = vpack.c.bf16 %v630, %v628
    %v669 = vpack.c.bf16 %v631, %v629
    %v670 = vpack.c.bf16 %v634, %v632
    %v671 = vpack.c.bf16 %v635, %v633
    %v672 = vpack.c.bf16 %v638, %v636
    %v673 = vpack.c.bf16 %v639, %v637
    %v674 = vpack.c.bf16 %v642, %v640
    %v675 = vpack.c.bf16 %v643, %v641
    %v676 = vld [vmem:[%s2] sm:$0xf]
    %v677 = vld [vmem:[%s4] sm:$0x3]
    %v678 = vld [vmem:[%s6] sm:$0x3]
    %v680 = vlaneseq
    %v681 = vshrl.u32 %v680, 7
    %v682 = vsub.s32 0, %v681
    %v683 = vrot.slane %v676, %v682
    %v684 = vlaneseq
    %v685 = vshrl.u32 %v684, 7
    %v686 = vsub.s32 1, %v685
    %v687 = vrot.slane %v676, %v686
    %v688 = vlaneseq
    %v689 = vshrl.u32 %v688, 7
    %v690 = vsub.s32 2, %v689
    %v691 = vrot.slane %v676, %v690
    %v692 = vlaneseq
    %v693 = vshrl.u32 %v692, 7
    %v694 = vsub.s32 3, %v693
    %v695 = vrot.slane %v676, %v694
    %700 = vmatprep.subr.bf16.mxu0 %v325
    %701 = vmatpush1.bf16.msra.mxu0 %v324
    %702 = vmatprep.subr.bf16.mxu0 %v329
    %703 = vmatpush1.bf16.msra.mxu0 %v328
    %704 = vmatprep.subr.bf16.mxu0 %v333
    %705 = vmatpush1.bf16.msra.mxu0 %v332
    %706 = vmatprep.subr.bf16.mxu0 %v337
    %707 = vmatpush1.bf16.msra.mxu0 %v336
    %708 = vmatprep.subr.bf16.mxu0 %v341
    %709 = vmatpush1.bf16.msra.mxu0 %v340
    %710 = vmatprep.subr.bf16.mxu0 %v345
    %711 = vmatpush1.bf16.msra.mxu0 %v344
    %712 = vmatprep.subr.bf16.mxu0 %v349
    %713 = vmatpush1.bf16.msra.mxu0 %v348
    %714 = vmatprep.subr.bf16.mxu0 %v353
    %715 = vmatpush1.bf16.msra.mxu0 %v352
    %716 = vmatprep.subr.bf16.mxu0 %v357
    %717 = vmatpush1.bf16.msra.mxu0 %v356
    %718 = vmatprep.subr.bf16.mxu0 %v361
    %719 = vmatpush1.bf16.msra.mxu0 %v360
    %720 = vmatprep.subr.bf16.mxu0 %v365
    %721 = vmatpush1.bf16.msra.mxu0 %v364
    %722 = vmatprep.subr.bf16.mxu0 %v369
    %723 = vmatpush1.bf16.msra.mxu0 %v368
    %724 = vmatprep.subr.bf16.mxu0 %v373
    %725 = vmatpush1.bf16.msra.mxu0 %v372
    %726 = vmatprep.subr.bf16.mxu0 %v377
    %727 = vmatpush1.bf16.msra.mxu0 %v376
    %728 = vmatprep.subr.bf16.mxu0 %v381
    %729 = vmatpush1.bf16.msra.mxu0 %v380
    %730 = vmatprep.subr.bf16.mxu0 %v385
    %731 = vmatpush1.bf16.msra.mxu0 %v384
    %732 = vmatprep.mubr.bf16.mxu0 %v159
    %733 = vmatmul.mubr.bf16.gmra.mrb[0].mxu0 %v158
    %v734 = vpop.f32.mrb[0].mxu0
    %v735 = vadd.f32 %v683, %v734
    %v736 = vpop.f32.mrb[0].mxu0
    %v737 = vadd.f32 %v687, %v736
    %v738 = vpop.f32.mrb[0].mxu0
    %v739 = vadd.f32 %v683, %v738
    %v740 = vpop.f32.mrb[0].mxu0
    %v741 = vadd.f32 %v687, %v740
    %742 = vmatprep.mubr.bf16.mxu0 %v161
    %743 = vmatmul.mubr.bf16.gmra.mrb[0].mxu0 %v160
    %v744 = vpop.f32.mrb[0].mxu0
    %v745 = vadd.f32 %v683, %v744
    %v746 = vpop.f32.mrb[0].mxu0
    %v747 = vadd.f32 %v687, %v746
    %v748 = vpop.f32.mrb[0].mxu0
    %v749 = vadd.f32 %v683, %v748
    %v750 = vpop.f32.mrb[0].mxu0
    %v751 = vadd.f32 %v687, %v750
    %752 = vmatprep.mubr.bf16.mxu0 %v163
    %753 = vmatmul.mubr.bf16.gmra.mrb[0].mxu0 %v162
    %v754 = vpop.f32.mrb[0].mxu0
    %v755 = vadd.f32 %v683, %v754
    %v756 = vpop.f32.mrb[0].mxu0
    %v757 = vadd.f32 %v687, %v756
    %v758 = vpop.f32.mrb[0].mxu0
    %v759 = vadd.f32 %v683, %v758
    %v760 = vpop.f32.mrb[0].mxu0
    %v761 = vadd.f32 %v687, %v760
    %762 = vmatprep.mubr.bf16.mxu0 %v165
    %763 = vmatmul.mubr.bf16.gmra.mrb[0].mxu0 %v164
    %v764 = vpop.f32.mrb[0].mxu0
    %v765 = vadd.f32 %v683, %v764
    %v766 = vpop.f32.mrb[0].mxu0
    %v767 = vadd.f32 %v687, %v766
    %v768 = vpop.f32.mrb[0].mxu0
    %v769 = vadd.f32 %v683, %v768
    %v770 = vpop.f32.mrb[0].mxu0
    %v771 = vadd.f32 %v687, %v770
    %772 = vmatprep.mubr.bf16.mxu0 %v167
    %773 = vmatmul.mubr.bf16.gmra.mrb[0].mxu0 %v166
    %v774 = vpop.f32.mrb[0].mxu0
    %v775 = vadd.f32 %v683, %v774
    %v776 = vpop.f32.mrb[0].mxu0
    %v777 = vadd.f32 %v687, %v776
    %v778 = vpop.f32.mrb[0].mxu0
    %v779 = vadd.f32 %v683, %v778
    %v780 = vpop.f32.mrb[0].mxu0
    %v781 = vadd.f32 %v687, %v780
    %782 = vmatprep.mubr.bf16.mxu0 %v169
    %783 = vmatmul.mubr.bf16.gmra.mrb[0].mxu0 %v168
    %v784 = vpop.f32.mrb[0].mxu0
    %v785 = vadd.f32 %v683, %v784
    %v786 = vpop.f32.mrb[0].mxu0
    %v787 = vadd.f32 %v687, %v786
    %v788 = vpop.f32.mrb[0].mxu0
    %v789 = vadd.f32 %v683, %v788
    %v790 = vpop.f32.mrb[0].mxu0
    %v791 = vadd.f32 %v687, %v790
    %792 = vmatprep.mubr.bf16.mxu0 %v171
    %793 = vmatmul.mubr.bf16.gmra.mrb[0].mxu0 %v170
    %v794 = vpop.f32.mrb[0].mxu0
    %v795 = vadd.f32 %v683, %v794
    %v796 = vpop.f32.mrb[0].mxu0
    %v797 = vadd.f32 %v687, %v796
    %v798 = vpop.f32.mrb[0].mxu0
    %v799 = vadd.f32 %v683, %v798
    %v800 = vpop.f32.mrb[0].mxu0
    %v801 = vadd.f32 %v687, %v800
    %802 = vmatprep.mubr.bf16.mxu0 %v173
    %803 = vmatmul.mubr.bf16.gmra.mrb[0].mxu0 %v172
    %v804 = vpop.f32.mrb[0].mxu0
    %v805 = vadd.f32 %v683, %v804
    %v806 = vpop.f32.mrb[0].mxu0
    %v807 = vadd.f32 %v687, %v806
    %v808 = vpop.f32.mrb[0].mxu0
    %v809 = vadd.f32 %v683, %v808
    %v810 = vpop.f32.mrb[0].mxu0
    %v811 = vadd.f32 %v687, %v810
    %812 = vmatprep.mubr.bf16.mxu0 %v175
    %813 = vmatmul.mubr.bf16.gmra.mrb[0].mxu0 %v174
    %v814 = vpop.f32.mrb[0].mxu0
    %v815 = vadd.f32 %v683, %v814
    %v816 = vpop.f32.mrb[0].mxu0
    %v817 = vadd.f32 %v687, %v816
    %v818 = vpop.f32.mrb[0].mxu0
    %v819 = vadd.f32 %v683, %v818
    %v820 = vpop.f32.mrb[0].mxu0
    %v821 = vadd.f32 %v687, %v820
    %822 = vmatprep.mubr.bf16.mxu0 %v177
    %823 = vmatmul.mubr.bf16.gmra.mrb[0].mxu0 %v176
    %v824 = vpop.f32.mrb[0].mxu0
    %v825 = vadd.f32 %v683, %v824
    %v826 = vpop.f32.mrb[0].mxu0
    %v827 = vadd.f32 %v687, %v826
    %v828 = vpop.f32.mrb[0].mxu0
    %v829 = vadd.f32 %v683, %v828
    %v830 = vpop.f32.mrb[0].mxu0
    %v831 = vadd.f32 %v687, %v830
    %832 = vmatprep.mubr.bf16.mxu0 %v179
    %833 = vmatmul.mubr.bf16.gmra.mrb[0].mxu0 %v178
    %v834 = vpop.f32.mrb[0].mxu0
    %v835 = vadd.f32 %v683, %v834
    %v836 = vpop.f32.mrb[0].mxu0
    %v837 = vadd.f32 %v687, %v836
    %v838 = vpop.f32.mrb[0].mxu0
    %v839 = vadd.f32 %v683, %v838
    %v840 = vpop.f32.mrb[0].mxu0
    %v841 = vadd.f32 %v687, %v840
    %842 = vmatprep.mubr.bf16.mxu0 %v181
    %843 = vmatmul.mubr.bf16.gmra.mrb[0].mxu0 %v180
    %v844 = vpop.f32.mrb[0].mxu0
    %v845 = vadd.f32 %v683, %v844
    %v846 = vpop.f32.mrb[0].mxu0
    %v847 = vadd.f32 %v687, %v846
    %v848 = vpop.f32.mrb[0].mxu0
    %v849 = vadd.f32 %v683, %v848
    %v850 = vpop.f32.mrb[0].mxu0
    %v851 = vadd.f32 %v687, %v850
    %852 = vmatprep.mubr.bf16.mxu0 %v183
    %853 = vmatmul.mubr.bf16.gmra.mrb[0].mxu0 %v182
    %v854 = vpop.f32.mrb[0].mxu0
    %v855 = vadd.f32 %v683, %v854
    %v856 = vpop.f32.mrb[0].mxu0
    %v857 = vadd.f32 %v687, %v856
    %v858 = vpop.f32.mrb[0].mxu0
    %v859 = vadd.f32 %v683, %v858
    %v860 = vpop.f32.mrb[0].mxu0
    %v861 = vadd.f32 %v687, %v860
    %862 = vmatprep.mubr.bf16.mxu0 %v185
    %863 = vmatmul.mubr.bf16.gmra.mrb[0].mxu0 %v184
    %v864 = vpop.f32.mrb[0].mxu0
    %v865 = vadd.f32 %v683, %v864
    %v866 = vpop.f32.mrb[0].mxu0
    %v867 = vadd.f32 %v687, %v866
    %v868 = vpop.f32.mrb[0].mxu0
    %v869 = vadd.f32 %v683, %v868
    %v870 = vpop.f32.mrb[0].mxu0
    %v871 = vadd.f32 %v687, %v870
    %872 = vmatprep.mubr.bf16.mxu0 %v187
    %873 = vmatmul.mubr.bf16.gmra.mrb[0].mxu0 %v186
    %v874 = vpop.f32.mrb[0].mxu0
    %v875 = vadd.f32 %v683, %v874
    %v876 = vpop.f32.mrb[0].mxu0
    %v877 = vadd.f32 %v687, %v876
    %v878 = vpop.f32.mrb[0].mxu0
    %v879 = vadd.f32 %v683, %v878
    %v880 = vpop.f32.mrb[0].mxu0
    %v881 = vadd.f32 %v687, %v880
    %882 = vmatprep.mubr.bf16.mxu0 %v189
    %883 = vmatmul.mubr.bf16.gmra.mrb[0].mxu0 %v188
    %v884 = vpop.f32.mrb[0].mxu0
    %v885 = vadd.f32 %v683, %v884
    %v886 = vpop.f32.mrb[0].mxu0
    %v887 = vadd.f32 %v687, %v886
    %v888 = vpop.f32.mrb[0].mxu0
    %v889 = vadd.f32 %v683, %v888
    %v890 = vpop.f32.mrb[0].mxu0
    %v891 = vadd.f32 %v687, %v890
    %892 = vmatprep.mubr.bf16.mxu0 %v191
    %893 = vmatmul.mubr.bf16.gmra.mrb[0].mxu0 %v190
    %v894 = vpop.f32.mrb[0].mxu0
    %v895 = vadd.f32 %v683, %v894
    %v896 = vpop.f32.mrb[0].mxu0
    %v897 = vadd.f32 %v687, %v896
    %v898 = vpop.f32.mrb[0].mxu0
    %v899 = vadd.f32 %v683, %v898
    %v900 = vpop.f32.mrb[0].mxu0
    %v901 = vadd.f32 %v687, %v900
    %902 = vmatprep.mubr.bf16.mxu0 %v193
    %903 = vmatmul.mubr.bf16.gmra.mrb[0].mxu0 %v192
    %v904 = vpop.f32.mrb[0].mxu0
    %v905 = vadd.f32 %v683, %v904
    %v906 = vpop.f32.mrb[0].mxu0
    %v907 = vadd.f32 %v687, %v906
    %v908 = vpop.f32.mrb[0].mxu0
    %v909 = vadd.f32 %v683, %v908
    %v910 = vpop.f32.mrb[0].mxu0
    %v911 = vadd.f32 %v687, %v910
    %912 = vmatprep.mubr.bf16.mxu0 %v195
    %913 = vmatmul.mubr.bf16.gmra.mrb[0].mxu0 %v194
    %v914 = vpop.f32.mrb[0].mxu0
    %v915 = vadd.f32 %v683, %v914
    %v916 = vpop.f32.mrb[0].mxu0
    %v917 = vadd.f32 %v687, %v916
    %v918 = vpop.f32.mrb[0].mxu0
    %v919 = vadd.f32 %v683, %v918
    %v920 = vpop.f32.mrb[0].mxu0
    %v921 = vadd.f32 %v687, %v920
    %922 = vdwg.mxu0
    %923 = vmatprep.subr.bf16.mxu0 %v327
    %924 = vmatpush1.bf16.msra.mxu0 %v326
    %925 = vmatprep.subr.bf16.mxu0 %v331
    %926 = vmatpush1.bf16.msra.mxu0 %v330
    %927 = vmatprep.subr.bf16.mxu0 %v335
    %928 = vmatpush1.bf16.msra.mxu0 %v334
    %929 = vmatprep.subr.bf16.mxu0 %v339
    %930 = vmatpush1.bf16.msra.mxu0 %v338
    %931 = vmatprep.subr.bf16.mxu0 %v343
    %932 = vmatpush1.bf16.msra.mxu0 %v342
    %933 = vmatprep.subr.bf16.mxu0 %v347
    %934 = vmatpush1.bf16.msra.mxu0 %v346
    %935 = vmatprep.subr.bf16.mxu0 %v351
    %936 = vmatpush1.bf16.msra.mxu0 %v350
    %937 = vmatprep.subr.bf16.mxu0 %v355
    %938 = vmatpush1.bf16.msra.mxu0 %v354
    %939 = vmatprep.subr.bf16.mxu0 %v359
    %940 = vmatpush1.bf16.msra.mxu0 %v358
    %941 = vmatprep.subr.bf16.mxu0 %v363
    %942 = vmatpush1.bf16.msra.mxu0 %v362
    %943 = vmatprep.subr.bf16.mxu0 %v367
    %944 = vmatpush1.bf16.msra.mxu0 %v366
    %945 = vmatprep.subr.bf16.mxu0 %v371
    %946 = vmatpush1.bf16.msra.mxu0 %v370
    %947 = vmatprep.subr.bf16.mxu0 %v375
    %948 = vmatpush1.bf16.msra.mxu0 %v374
    %949 = vmatprep.subr.bf16.mxu0 %v379
    %950 = vmatpush1.bf16.msra.mxu0 %v378
    %951 = vmatprep.subr.bf16.mxu0 %v383
    %952 = vmatpush1.bf16.msra.mxu0 %v382
    %953 = vmatprep.subr.bf16.mxu0 %v387
    %954 = vmatpush1.bf16.msra.mxu0 %v386
    %955 = vmatprep.mubr.bf16.mxu0 %v159
    %956 = vmatmul.mubr.bf16.gmra.mrb[0].mxu0 %v158
    %v957 = vpop.f32.mrb[0].mxu0
    %v958 = vadd.f32 %v691, %v957
    %v959 = vpop.f32.mrb[0].mxu0
    %v960 = vadd.f32 %v695, %v959
    %v961 = vpop.f32.mrb[0].mxu0
    %v962 = vadd.f32 %v691, %v961
    %v963 = vpop.f32.mrb[0].mxu0
    %v964 = vadd.f32 %v695, %v963
    %965 = vmatprep.mubr.bf16.mxu0 %v161
    %966 = vmatmul.mubr.bf16.gmra.mrb[0].mxu0 %v160
    %v967 = vpop.f32.mrb[0].mxu0
    %v968 = vadd.f32 %v691, %v967
    %v969 = vpop.f32.mrb[0].mxu0
    %v970 = vadd.f32 %v695, %v969
    %v971 = vpop.f32.mrb[0].mxu0
    %v972 = vadd.f32 %v691, %v971
    %v973 = vpop.f32.mrb[0].mxu0
    %v974 = vadd.f32 %v695, %v973
    %975 = vmatprep.mubr.bf16.mxu0 %v163
    %976 = vmatmul.mubr.bf16.gmra.mrb[0].mxu0 %v162
    %v977 = vpop.f32.mrb[0].mxu0
    %v978 = vadd.f32 %v691, %v977
    %v979 = vpop.f32.mrb[0].mxu0
    %v980 = vadd.f32 %v695, %v979
    %v981 = vpop.f32.mrb[0].mxu0
    %v982 = vadd.f32 %v691, %v981
    %v983 = vpop.f32.mrb[0].mxu0
    %v984 = vadd.f32 %v695, %v983
    %985 = vmatprep.mubr.bf16.mxu0 %v165
    %986 = vmatmul.mubr.bf16.gmra.mrb[0].mxu0 %v164
    %v987 = vpop.f32.mrb[0].mxu0
    %v988 = vadd.f32 %v691, %v987
    %v989 = vpop.f32.mrb[0].mxu0
    %v990 = vadd.f32 %v695, %v989
    %v991 = vpop.f32.mrb[0].mxu0
    %v992 = vadd.f32 %v691, %v991
    %v993 = vpop.f32.mrb[0].mxu0
    %v994 = vadd.f32 %v695, %v993
    %995 = vmatprep.mubr.bf16.mxu0 %v167
    %996 = vmatmul.mubr.bf16.gmra.mrb[0].mxu0 %v166
    %v997 = vpop.f32.mrb[0].mxu0
    %v998 = vadd.f32 %v691, %v997
    %v999 = vpop.f32.mrb[0].mxu0
    %v1000 = vadd.f32 %v695, %v999
    %v1001 = vpop.f32.mrb[0].mxu0
    %v1002 = vadd.f32 %v691, %v1001
    %v1003 = vpop.f32.mrb[0].mxu0
    %v1004 = vadd.f32 %v695, %v1003
    %1005 = vmatprep.mubr.bf16.mxu0 %v169
    %1006 = vmatmul.mubr.bf16.gmra.mrb[0].mxu0 %v168
    %v1007 = vpop.f32.mrb[0].mxu0
    %v1008 = vadd.f32 %v691, %v1007
    %v1009 = vpop.f32.mrb[0].mxu0
    %v1010 = vadd.f32 %v695, %v1009
    %v1011 = vpop.f32.mrb[0].mxu0
    %v1012 = vadd.f32 %v691, %v1011
    %v1013 = vpop.f32.mrb[0].mxu0
    %v1014 = vadd.f32 %v695, %v1013
    %1015 = vmatprep.mubr.bf16.mxu0 %v171
    %1016 = vmatmul.mubr.bf16.gmra.mrb[0].mxu0 %v170
    %v1017 = vpop.f32.mrb[0].mxu0
    %v1018 = vadd.f32 %v691, %v1017
    %v1019 = vpop.f32.mrb[0].mxu0
    %v1020 = vadd.f32 %v695, %v1019
    %v1021 = vpop.f32.mrb[0].mxu0
    %v1022 = vadd.f32 %v691, %v1021
    %v1023 = vpop.f32.mrb[0].mxu0
    %v1024 = vadd.f32 %v695, %v1023
    %1025 = vmatprep.mubr.bf16.mxu0 %v173
    %1026 = vmatmul.mubr.bf16.gmra.mrb[0].mxu0 %v172
    %v1027 = vpop.f32.mrb[0].mxu0
    %v1028 = vadd.f32 %v691, %v1027
    %v1029 = vpop.f32.mrb[0].mxu0
    %v1030 = vadd.f32 %v695, %v1029
    %v1031 = vpop.f32.mrb[0].mxu0
    %v1032 = vadd.f32 %v691, %v1031
    %v1033 = vpop.f32.mrb[0].mxu0
    %v1034 = vadd.f32 %v695, %v1033
    %1035 = vmatprep.mubr.bf16.mxu0 %v175
    %1036 = vmatmul.mubr.bf16.gmra.mrb[0].mxu0 %v174
    %v1037 = vpop.f32.mrb[0].mxu0
    %v1038 = vadd.f32 %v691, %v1037
    %v1039 = vpop.f32.mrb[0].mxu0
    %v1040 = vadd.f32 %v695, %v1039
    %v1041 = vpop.f32.mrb[0].mxu0
    %v1042 = vadd.f32 %v691, %v1041
    %v1043 = vpop.f32.mrb[0].mxu0
    %v1044 = vadd.f32 %v695, %v1043
    %1045 = vmatprep.mubr.bf16.mxu0 %v177
    %1046 = vmatmul.mubr.bf16.gmra.mrb[0].mxu0 %v176
    %v1047 = vpop.f32.mrb[0].mxu0
    %v1048 = vadd.f32 %v691, %v1047
    %v1049 = vpop.f32.mrb[0].mxu0
    %v1050 = vadd.f32 %v695, %v1049
    %v1051 = vpop.f32.mrb[0].mxu0
    %v1052 = vadd.f32 %v691, %v1051
    %v1053 = vpop.f32.mrb[0].mxu0
    %v1054 = vadd.f32 %v695, %v1053
    %1055 = vmatprep.mubr.bf16.mxu0 %v179
    %1056 = vmatmul.mubr.bf16.gmra.mrb[0].mxu0 %v178
    %v1057 = vpop.f32.mrb[0].mxu0
    %v1058 = vadd.f32 %v691, %v1057
    %v1059 = vpop.f32.mrb[0].mxu0
    %v1060 = vadd.f32 %v695, %v1059
    %v1061 = vpop.f32.mrb[0].mxu0
    %v1062 = vadd.f32 %v691, %v1061
    %v1063 = vpop.f32.mrb[0].mxu0
    %v1064 = vadd.f32 %v695, %v1063
    %1065 = vmatprep.mubr.bf16.mxu0 %v181
    %1066 = vmatmul.mubr.bf16.gmra.mrb[0].mxu0 %v180
    %v1067 = vpop.f32.mrb[0].mxu0
    %v1068 = vadd.f32 %v691, %v1067
    %v1069 = vpop.f32.mrb[0].mxu0
    %v1070 = vadd.f32 %v695, %v1069
    %v1071 = vpop.f32.mrb[0].mxu0
    %v1072 = vadd.f32 %v691, %v1071
    %v1073 = vpop.f32.mrb[0].mxu0
    %v1074 = vadd.f32 %v695, %v1073
    %1075 = vmatprep.mubr.bf16.mxu0 %v183
    %1076 = vmatmul.mubr.bf16.gmra.mrb[0].mxu0 %v182
    %v1077 = vpop.f32.mrb[0].mxu0
    %v1078 = vadd.f32 %v691, %v1077
    %v1079 = vpop.f32.mrb[0].mxu0
    %v1080 = vadd.f32 %v695, %v1079
    %v1081 = vpop.f32.mrb[0].mxu0
    %v1082 = vadd.f32 %v691, %v1081
    %v1083 = vpop.f32.mrb[0].mxu0
    %v1084 = vadd.f32 %v695, %v1083
    %1085 = vmatprep.mubr.bf16.mxu0 %v185
    %1086 = vmatmul.mubr.bf16.gmra.mrb[0].mxu0 %v184
    %v1087 = vpop.f32.mrb[0].mxu0
    %v1088 = vadd.f32 %v691, %v1087
    %v1089 = vpop.f32.mrb[0].mxu0
    %v1090 = vadd.f32 %v695, %v1089
    %v1091 = vpop.f32.mrb[0].mxu0
    %v1092 = vadd.f32 %v691, %v1091
    %v1093 = vpop.f32.mrb[0].mxu0
    %v1094 = vadd.f32 %v695, %v1093
    %1095 = vmatprep.mubr.bf16.mxu0 %v187
    %1096 = vmatmul.mubr.bf16.gmra.mrb[0].mxu0 %v186
    %v1097 = vpop.f32.mrb[0].mxu0
    %v1098 = vadd.f32 %v691, %v1097
    %v1099 = vpop.f32.mrb[0].mxu0
    %v1100 = vadd.f32 %v695, %v1099
    %v1101 = vpop.f32.mrb[0].mxu0
    %v1102 = vadd.f32 %v691, %v1101
    %v1103 = vpop.f32.mrb[0].mxu0
    %v1104 = vadd.f32 %v695, %v1103
    %1105 = vmatprep.mubr.bf16.mxu0 %v189
    %1106 = vmatmul.mubr.bf16.gmra.mrb[0].mxu0 %v188
    %v1107 = vpop.f32.mrb[0].mxu0
    %v1108 = vadd.f32 %v691, %v1107
    %v1109 = vpop.f32.mrb[0].mxu0
    %v1110 = vadd.f32 %v695, %v1109
    %v1111 = vpop.f32.mrb[0].mxu0
    %v1112 = vadd.f32 %v691, %v1111
    %v1113 = vpop.f32.mrb[0].mxu0
    %v1114 = vadd.f32 %v695, %v1113
    %1115 = vmatprep.mubr.bf16.mxu0 %v191
    %1116 = vmatmul.mubr.bf16.gmra.mrb[0].mxu0 %v190
    %v1117 = vpop.f32.mrb[0].mxu0
    %v1118 = vadd.f32 %v691, %v1117
    %v1119 = vpop.f32.mrb[0].mxu0
    %v1120 = vadd.f32 %v695, %v1119
    %v1121 = vpop.f32.mrb[0].mxu0
    %v1122 = vadd.f32 %v691, %v1121
    %v1123 = vpop.f32.mrb[0].mxu0
    %v1124 = vadd.f32 %v695, %v1123
    %1125 = vmatprep.mubr.bf16.mxu0 %v193
    %1126 = vmatmul.mubr.bf16.gmra.mrb[0].mxu0 %v192
    %v1127 = vpop.f32.mrb[0].mxu0
    %v1128 = vadd.f32 %v691, %v1127
    %v1129 = vpop.f32.mrb[0].mxu0
    %v1130 = vadd.f32 %v695, %v1129
    %v1131 = vpop.f32.mrb[0].mxu0
    %v1132 = vadd.f32 %v691, %v1131
    %v1133 = vpop.f32.mrb[0].mxu0
    %v1134 = vadd.f32 %v695, %v1133
    %1135 = vmatprep.mubr.bf16.mxu0 %v195
    %1136 = vmatmul.mubr.bf16.gmra.mrb[0].mxu0 %v194
    %v1137 = vpop.f32.mrb[0].mxu0
    %v1138 = vadd.f32 %v691, %v1137
    %v1139 = vpop.f32.mrb[0].mxu0
    %v1140 = vadd.f32 %v695, %v1139
    %v1141 = vpop.f32.mrb[0].mxu0
    %v1142 = vadd.f32 %v691, %v1141
    %v1143 = vpop.f32.mrb[0].mxu0
    %v1144 = vadd.f32 %v695, %v1143
    %1145 = vdwg.mxu0
    %v1146 = vmax.f32 %v735, 0.0
    %v1147 = vmax.f32 %v737, 0.0
    %v1148 = vmax.f32 %v958, 0.0
    %v1149 = vmax.f32 %v960, 0.0
    %v1150 = vmax.f32 %v739, 0.0
    %v1151 = vmax.f32 %v741, 0.0
    %v1152 = vmax.f32 %v962, 0.0
    %v1153 = vmax.f32 %v964, 0.0
    %v1154 = vmax.f32 %v745, 0.0
    %v1155 = vmax.f32 %v747, 0.0
    %v1156 = vmax.f32 %v968, 0.0
    %v1157 = vmax.f32 %v970, 0.0
    %v1158 = vmax.f32 %v749, 0.0
    %v1159 = vmax.f32 %v751, 0.0
    %v1160 = vmax.f32 %v972, 0.0
    %v1161 = vmax.f32 %v974, 0.0
    %v1162 = vmax.f32 %v755, 0.0
    %v1163 = vmax.f32 %v757, 0.0
    %v1164 = vmax.f32 %v978, 0.0
    %v1165 = vmax.f32 %v980, 0.0
    %v1166 = vmax.f32 %v759, 0.0
    %v1167 = vmax.f32 %v761, 0.0
    %v1168 = vmax.f32 %v982, 0.0
    %v1169 = vmax.f32 %v984, 0.0
    %v1170 = vmax.f32 %v765, 0.0
    %v1171 = vmax.f32 %v767, 0.0
    %v1172 = vmax.f32 %v988, 0.0
    %v1173 = vmax.f32 %v990, 0.0
    %v1174 = vmax.f32 %v769, 0.0
    %v1175 = vmax.f32 %v771, 0.0
    %v1176 = vmax.f32 %v992, 0.0
    %v1177 = vmax.f32 %v994, 0.0
    %v1178 = vmax.f32 %v775, 0.0
    %v1179 = vmax.f32 %v777, 0.0
    %v1180 = vmax.f32 %v998, 0.0
    %v1181 = vmax.f32 %v1000, 0.0
    %v1182 = vmax.f32 %v779, 0.0
    %v1183 = vmax.f32 %v781, 0.0
    %v1184 = vmax.f32 %v1002, 0.0
    %v1185 = vmax.f32 %v1004, 0.0
    %v1186 = vmax.f32 %v785, 0.0
    %v1187 = vmax.f32 %v787, 0.0
    %v1188 = vmax.f32 %v1008, 0.0
    %v1189 = vmax.f32 %v1010, 0.0
    %v1190 = vmax.f32 %v789, 0.0
    %v1191 = vmax.f32 %v791, 0.0
    %v1192 = vmax.f32 %v1012, 0.0
    %v1193 = vmax.f32 %v1014, 0.0
    %v1194 = vmax.f32 %v795, 0.0
    %v1195 = vmax.f32 %v797, 0.0
    %v1196 = vmax.f32 %v1018, 0.0
    %v1197 = vmax.f32 %v1020, 0.0
    %v1198 = vmax.f32 %v799, 0.0
    %v1199 = vmax.f32 %v801, 0.0
    %v1200 = vmax.f32 %v1022, 0.0
    %v1201 = vmax.f32 %v1024, 0.0
    %v1202 = vmax.f32 %v805, 0.0
    %v1203 = vmax.f32 %v807, 0.0
    %v1204 = vmax.f32 %v1028, 0.0
    %v1205 = vmax.f32 %v1030, 0.0
    %v1206 = vmax.f32 %v809, 0.0
    %v1207 = vmax.f32 %v811, 0.0
    %v1208 = vmax.f32 %v1032, 0.0
    %v1209 = vmax.f32 %v1034, 0.0
    %v1210 = vmax.f32 %v815, 0.0
    %v1211 = vmax.f32 %v817, 0.0
    %v1212 = vmax.f32 %v1038, 0.0
    %v1213 = vmax.f32 %v1040, 0.0
    %v1214 = vmax.f32 %v819, 0.0
    %v1215 = vmax.f32 %v821, 0.0
    %v1216 = vmax.f32 %v1042, 0.0
    %v1217 = vmax.f32 %v1044, 0.0
    %v1218 = vmax.f32 %v825, 0.0
    %v1219 = vmax.f32 %v827, 0.0
    %v1220 = vmax.f32 %v1048, 0.0
    %v1221 = vmax.f32 %v1050, 0.0
    %v1222 = vmax.f32 %v829, 0.0
    %v1223 = vmax.f32 %v831, 0.0
    %v1224 = vmax.f32 %v1052, 0.0
    %v1225 = vmax.f32 %v1054, 0.0
    %v1226 = vmax.f32 %v835, 0.0
    %v1227 = vmax.f32 %v837, 0.0
    %v1228 = vmax.f32 %v1058, 0.0
    %v1229 = vmax.f32 %v1060, 0.0
    %v1230 = vmax.f32 %v839, 0.0
    %v1231 = vmax.f32 %v841, 0.0
    %v1232 = vmax.f32 %v1062, 0.0
    %v1233 = vmax.f32 %v1064, 0.0
    %v1234 = vmax.f32 %v845, 0.0
    %v1235 = vmax.f32 %v847, 0.0
    %v1236 = vmax.f32 %v1068, 0.0
    %v1237 = vmax.f32 %v1070, 0.0
    %v1238 = vmax.f32 %v849, 0.0
    %v1239 = vmax.f32 %v851, 0.0
    %v1240 = vmax.f32 %v1072, 0.0
    %v1241 = vmax.f32 %v1074, 0.0
    %v1242 = vmax.f32 %v855, 0.0
    %v1243 = vmax.f32 %v857, 0.0
    %v1244 = vmax.f32 %v1078, 0.0
    %v1245 = vmax.f32 %v1080, 0.0
    %v1246 = vmax.f32 %v859, 0.0
    %v1247 = vmax.f32 %v861, 0.0
    %v1248 = vmax.f32 %v1082, 0.0
    %v1249 = vmax.f32 %v1084, 0.0
    %v1250 = vmax.f32 %v865, 0.0
    %v1251 = vmax.f32 %v867, 0.0
    %v1252 = vmax.f32 %v1088, 0.0
    %v1253 = vmax.f32 %v1090, 0.0
    %v1254 = vmax.f32 %v869, 0.0
    %v1255 = vmax.f32 %v871, 0.0
    %v1256 = vmax.f32 %v1092, 0.0
    %v1257 = vmax.f32 %v1094, 0.0
    %v1258 = vmax.f32 %v875, 0.0
    %v1259 = vmax.f32 %v877, 0.0
    %v1260 = vmax.f32 %v1098, 0.0
    %v1261 = vmax.f32 %v1100, 0.0
    %v1262 = vmax.f32 %v879, 0.0
    %v1263 = vmax.f32 %v881, 0.0
    %v1264 = vmax.f32 %v1102, 0.0
    %v1265 = vmax.f32 %v1104, 0.0
    %v1266 = vmax.f32 %v885, 0.0
    %v1267 = vmax.f32 %v887, 0.0
    %v1268 = vmax.f32 %v1108, 0.0
    %v1269 = vmax.f32 %v1110, 0.0
    %v1270 = vmax.f32 %v889, 0.0
    %v1271 = vmax.f32 %v891, 0.0
    %v1272 = vmax.f32 %v1112, 0.0
    %v1273 = vmax.f32 %v1114, 0.0
    %v1274 = vmax.f32 %v895, 0.0
    %v1275 = vmax.f32 %v897, 0.0
    %v1276 = vmax.f32 %v1118, 0.0
    %v1277 = vmax.f32 %v1120, 0.0
    %v1278 = vmax.f32 %v899, 0.0
    %v1279 = vmax.f32 %v901, 0.0
    %v1280 = vmax.f32 %v1122, 0.0
    %v1281 = vmax.f32 %v1124, 0.0
    %v1282 = vmax.f32 %v905, 0.0
    %v1283 = vmax.f32 %v907, 0.0
    %v1284 = vmax.f32 %v1128, 0.0
    %v1285 = vmax.f32 %v1130, 0.0
    %v1286 = vmax.f32 %v909, 0.0
    %v1287 = vmax.f32 %v911, 0.0
    %v1288 = vmax.f32 %v1132, 0.0
    %v1289 = vmax.f32 %v1134, 0.0
    %v1290 = vmax.f32 %v915, 0.0
    %v1291 = vmax.f32 %v917, 0.0
    %v1292 = vmax.f32 %v1138, 0.0
    %v1293 = vmax.f32 %v1140, 0.0
    %v1294 = vmax.f32 %v919, 0.0
    %v1295 = vmax.f32 %v921, 0.0
    %v1296 = vmax.f32 %v1142, 0.0
    %v1297 = vmax.f32 %v1144, 0.0
    %v1298 = vpack.c.bf16 %v1150, %v1146
    %v1299 = vpack.c.bf16 %v1151, %v1147
    %v1300 = vpack.c.bf16 %v1152, %v1148
    %v1301 = vpack.c.bf16 %v1153, %v1149
    %v1302 = vpack.c.bf16 %v1158, %v1154
    %v1303 = vpack.c.bf16 %v1159, %v1155
    %v1304 = vpack.c.bf16 %v1160, %v1156
    %v1305 = vpack.c.bf16 %v1161, %v1157
    %v1306 = vpack.c.bf16 %v1166, %v1162
    %v1307 = vpack.c.bf16 %v1167, %v1163
    %v1308 = vpack.c.bf16 %v1168, %v1164
    %v1309 = vpack.c.bf16 %v1169, %v1165
    %v1310 = vpack.c.bf16 %v1174, %v1170
    %v1311 = vpack.c.bf16 %v1175, %v1171
    %v1312 = vpack.c.bf16 %v1176, %v1172
    %v1313 = vpack.c.bf16 %v1177, %v1173
    %v1314 = vpack.c.bf16 %v1182, %v1178
    %v1315 = vpack.c.bf16 %v1183, %v1179
    %v1316 = vpack.c.bf16 %v1184, %v1180
    %v1317 = vpack.c.bf16 %v1185, %v1181
    %v1318 = vpack.c.bf16 %v1190, %v1186
    %v1319 = vpack.c.bf16 %v1191, %v1187
    %v1320 = vpack.c.bf16 %v1192, %v1188
    %v1321 = vpack.c.bf16 %v1193, %v1189
    %v1322 = vpack.c.bf16 %v1198, %v1194
    %v1323 = vpack.c.bf16 %v1199, %v1195
    %v1324 = vpack.c.bf16 %v1200, %v1196
    %v1325 = vpack.c.bf16 %v1201, %v1197
    %v1326 = vpack.c.bf16 %v1206, %v1202
    %v1327 = vpack.c.bf16 %v1207, %v1203
    %v1328 = vpack.c.bf16 %v1208, %v1204
    %v1329 = vpack.c.bf16 %v1209, %v1205
    %v1330 = vpack.c.bf16 %v1214, %v1210
    %v1331 = vpack.c.bf16 %v1215, %v1211
    %v1332 = vpack.c.bf16 %v1216, %v1212
    %v1333 = vpack.c.bf16 %v1217, %v1213
    %v1334 = vpack.c.bf16 %v1222, %v1218
    %v1335 = vpack.c.bf16 %v1223, %v1219
    %v1336 = vpack.c.bf16 %v1224, %v1220
    %v1337 = vpack.c.bf16 %v1225, %v1221
    %v1338 = vpack.c.bf16 %v1230, %v1226
    %v1339 = vpack.c.bf16 %v1231, %v1227
    %v1340 = vpack.c.bf16 %v1232, %v1228
    %v1341 = vpack.c.bf16 %v1233, %v1229
    %v1342 = vpack.c.bf16 %v1238, %v1234
    %v1343 = vpack.c.bf16 %v1239, %v1235
    %v1344 = vpack.c.bf16 %v1240, %v1236
    %v1345 = vpack.c.bf16 %v1241, %v1237
    %v1346 = vpack.c.bf16 %v1246, %v1242
    %v1347 = vpack.c.bf16 %v1247, %v1243
    %v1348 = vpack.c.bf16 %v1248, %v1244
    %v1349 = vpack.c.bf16 %v1249, %v1245
    %v1350 = vpack.c.bf16 %v1254, %v1250
    %v1351 = vpack.c.bf16 %v1255, %v1251
    %v1352 = vpack.c.bf16 %v1256, %v1252
    %v1353 = vpack.c.bf16 %v1257, %v1253
    %v1354 = vpack.c.bf16 %v1262, %v1258
    %v1355 = vpack.c.bf16 %v1263, %v1259
    %v1356 = vpack.c.bf16 %v1264, %v1260
    %v1357 = vpack.c.bf16 %v1265, %v1261
    %v1358 = vpack.c.bf16 %v1270, %v1266
    %v1359 = vpack.c.bf16 %v1271, %v1267
    %v1360 = vpack.c.bf16 %v1272, %v1268
    %v1361 = vpack.c.bf16 %v1273, %v1269
    %v1362 = vpack.c.bf16 %v1278, %v1274
    %v1363 = vpack.c.bf16 %v1279, %v1275
    %v1364 = vpack.c.bf16 %v1280, %v1276
    %v1365 = vpack.c.bf16 %v1281, %v1277
    %v1366 = vpack.c.bf16 %v1286, %v1282
    %v1367 = vpack.c.bf16 %v1287, %v1283
    %v1368 = vpack.c.bf16 %v1288, %v1284
    %v1369 = vpack.c.bf16 %v1289, %v1285
    %v1370 = vpack.c.bf16 %v1294, %v1290
    %v1371 = vpack.c.bf16 %v1295, %v1291
    %v1372 = vpack.c.bf16 %v1296, %v1292
    %v1373 = vpack.c.bf16 %v1297, %v1293
    %v1375 = vlaneseq
    %v1376 = vshrl.u32 %v1375, 7
    %v1377 = vsub.s32 0, %v1376
    %v1378 = vrot.slane %v677, %v1377
    %v1379 = vlaneseq
    %v1380 = vshrl.u32 %v1379, 7
    %v1381 = vsub.s32 1, %v1380
    %v1382 = vrot.slane %v677, %v1381
    %1385 = vmatprep.subr.bf16.mxu0 %v517
    %1386 = vmatpush1.bf16.msra.mxu0 %v516
    %1387 = vmatprep.subr.bf16.mxu0 %v519
    %1388 = vmatpush1.bf16.msra.mxu0 %v518
    %1389 = vmatprep.subr.bf16.mxu0 %v521
    %1390 = vmatpush1.bf16.msra.mxu0 %v520
    %1391 = vmatprep.subr.bf16.mxu0 %v523
    %1392 = vmatpush1.bf16.msra.mxu0 %v522
    %1393 = vmatprep.subr.bf16.mxu0 %v525
    %1394 = vmatpush1.bf16.msra.mxu0 %v524
    %1395 = vmatprep.subr.bf16.mxu0 %v527
    %1396 = vmatpush1.bf16.msra.mxu0 %v526
    %1397 = vmatprep.subr.bf16.mxu0 %v529
    %1398 = vmatpush1.bf16.msra.mxu0 %v528
    %1399 = vmatprep.subr.bf16.mxu0 %v531
    %1400 = vmatpush1.bf16.msra.mxu0 %v530
    %1401 = vmatprep.subr.bf16.mxu0 %v533
    %1402 = vmatpush1.bf16.msra.mxu0 %v532
    %1403 = vmatprep.subr.bf16.mxu0 %v535
    %1404 = vmatpush1.bf16.msra.mxu0 %v534
    %1405 = vmatprep.subr.bf16.mxu0 %v537
    %1406 = vmatpush1.bf16.msra.mxu0 %v536
    %1407 = vmatprep.subr.bf16.mxu0 %v539
    %1408 = vmatpush1.bf16.msra.mxu0 %v538
    %1409 = vmatprep.subr.bf16.mxu0 %v541
    %1410 = vmatpush1.bf16.msra.mxu0 %v540
    %1411 = vmatprep.subr.bf16.mxu0 %v543
    %1412 = vmatpush1.bf16.msra.mxu0 %v542
    %1413 = vmatprep.subr.bf16.mxu0 %v545
    %1414 = vmatpush1.bf16.msra.mxu0 %v544
    %1415 = vmatprep.subr.bf16.mxu0 %v547
    %1416 = vmatpush1.bf16.msra.mxu0 %v546
    %1417 = vmatprep.mubr.bf16.mxu0 %v1299
    %1418 = vmatmul.mubr.bf16.gmra.mrb[0].mxu0 %v1298
    %v1419 = vpop.f32.mrb[0].mxu0
    %v1420 = vadd.f32 %v1378, %v1419
    %v1421 = vpop.f32.mrb[0].mxu0
    %v1422 = vadd.f32 %v1382, %v1421
    %v1423 = vpop.f32.mrb[0].mxu0
    %v1424 = vadd.f32 %v1378, %v1423
    %v1425 = vpop.f32.mrb[0].mxu0
    %v1426 = vadd.f32 %v1382, %v1425
    %1427 = vmatprep.mubr.bf16.mxu0 %v1303
    %1428 = vmatmul.mubr.bf16.gmra.mrb[0].mxu0 %v1302
    %v1429 = vpop.f32.mrb[0].mxu0
    %v1430 = vadd.f32 %v1378, %v1429
    %v1431 = vpop.f32.mrb[0].mxu0
    %v1432 = vadd.f32 %v1382, %v1431
    %v1433 = vpop.f32.mrb[0].mxu0
    %v1434 = vadd.f32 %v1378, %v1433
    %v1435 = vpop.f32.mrb[0].mxu0
    %v1436 = vadd.f32 %v1382, %v1435
    %1437 = vmatprep.mubr.bf16.mxu0 %v1307
    %1438 = vmatmul.mubr.bf16.gmra.mrb[0].mxu0 %v1306
    %v1439 = vpop.f32.mrb[0].mxu0
    %v1440 = vadd.f32 %v1378, %v1439
    %v1441 = vpop.f32.mrb[0].mxu0
    %v1442 = vadd.f32 %v1382, %v1441
    %v1443 = vpop.f32.mrb[0].mxu0
    %v1444 = vadd.f32 %v1378, %v1443
    %v1445 = vpop.f32.mrb[0].mxu0
    %v1446 = vadd.f32 %v1382, %v1445
    %1447 = vmatprep.mubr.bf16.mxu0 %v1311
    %1448 = vmatmul.mubr.bf16.gmra.mrb[0].mxu0 %v1310
    %v1449 = vpop.f32.mrb[0].mxu0
    %v1450 = vadd.f32 %v1378, %v1449
    %v1451 = vpop.f32.mrb[0].mxu0
    %v1452 = vadd.f32 %v1382, %v1451
    %v1453 = vpop.f32.mrb[0].mxu0
    %v1454 = vadd.f32 %v1378, %v1453
    %v1455 = vpop.f32.mrb[0].mxu0
    %v1456 = vadd.f32 %v1382, %v1455
    %1457 = vmatprep.mubr.bf16.mxu0 %v1315
    %1458 = vmatmul.mubr.bf16.gmra.mrb[0].mxu0 %v1314
    %v1459 = vpop.f32.mrb[0].mxu0
    %v1460 = vadd.f32 %v1378, %v1459
    %v1461 = vpop.f32.mrb[0].mxu0
    %v1462 = vadd.f32 %v1382, %v1461
    %v1463 = vpop.f32.mrb[0].mxu0
    %v1464 = vadd.f32 %v1378, %v1463
    %v1465 = vpop.f32.mrb[0].mxu0
    %v1466 = vadd.f32 %v1382, %v1465
    %1467 = vmatprep.mubr.bf16.mxu0 %v1319
    %1468 = vmatmul.mubr.bf16.gmra.mrb[0].mxu0 %v1318
    %v1469 = vpop.f32.mrb[0].mxu0
    %v1470 = vadd.f32 %v1378, %v1469
    %v1471 = vpop.f32.mrb[0].mxu0
    %v1472 = vadd.f32 %v1382, %v1471
    %v1473 = vpop.f32.mrb[0].mxu0
    %v1474 = vadd.f32 %v1378, %v1473
    %v1475 = vpop.f32.mrb[0].mxu0
    %v1476 = vadd.f32 %v1382, %v1475
    %1477 = vmatprep.mubr.bf16.mxu0 %v1323
    %1478 = vmatmul.mubr.bf16.gmra.mrb[0].mxu0 %v1322
    %v1479 = vpop.f32.mrb[0].mxu0
    %v1480 = vadd.f32 %v1378, %v1479
    %v1481 = vpop.f32.mrb[0].mxu0
    %v1482 = vadd.f32 %v1382, %v1481
    %v1483 = vpop.f32.mrb[0].mxu0
    %v1484 = vadd.f32 %v1378, %v1483
    %v1485 = vpop.f32.mrb[0].mxu0
    %v1486 = vadd.f32 %v1382, %v1485
    %1487 = vmatprep.mubr.bf16.mxu0 %v1327
    %1488 = vmatmul.mubr.bf16.gmra.mrb[0].mxu0 %v1326
    %v1489 = vpop.f32.mrb[0].mxu0
    %v1490 = vadd.f32 %v1378, %v1489
    %v1491 = vpop.f32.mrb[0].mxu0
    %v1492 = vadd.f32 %v1382, %v1491
    %v1493 = vpop.f32.mrb[0].mxu0
    %v1494 = vadd.f32 %v1378, %v1493
    %v1495 = vpop.f32.mrb[0].mxu0
    %v1496 = vadd.f32 %v1382, %v1495
    %1497 = vmatprep.mubr.bf16.mxu0 %v1331
    %1498 = vmatmul.mubr.bf16.gmra.mrb[0].mxu0 %v1330
    %v1499 = vpop.f32.mrb[0].mxu0
    %v1500 = vadd.f32 %v1378, %v1499
    %v1501 = vpop.f32.mrb[0].mxu0
    %v1502 = vadd.f32 %v1382, %v1501
    %v1503 = vpop.f32.mrb[0].mxu0
    %v1504 = vadd.f32 %v1378, %v1503
    %v1505 = vpop.f32.mrb[0].mxu0
    %v1506 = vadd.f32 %v1382, %v1505
    %1507 = vmatprep.mubr.bf16.mxu0 %v1335
    %1508 = vmatmul.mubr.bf16.gmra.mrb[0].mxu0 %v1334
    %v1509 = vpop.f32.mrb[0].mxu0
    %v1510 = vadd.f32 %v1378, %v1509
    %v1511 = vpop.f32.mrb[0].mxu0
    %v1512 = vadd.f32 %v1382, %v1511
    %v1513 = vpop.f32.mrb[0].mxu0
    %v1514 = vadd.f32 %v1378, %v1513
    %v1515 = vpop.f32.mrb[0].mxu0
    %v1516 = vadd.f32 %v1382, %v1515
    %1517 = vmatprep.mubr.bf16.mxu0 %v1339
    %1518 = vmatmul.mubr.bf16.gmra.mrb[0].mxu0 %v1338
    %v1519 = vpop.f32.mrb[0].mxu0
    %v1520 = vadd.f32 %v1378, %v1519
    %v1521 = vpop.f32.mrb[0].mxu0
    %v1522 = vadd.f32 %v1382, %v1521
    %v1523 = vpop.f32.mrb[0].mxu0
    %v1524 = vadd.f32 %v1378, %v1523
    %v1525 = vpop.f32.mrb[0].mxu0
    %v1526 = vadd.f32 %v1382, %v1525
    %1527 = vmatprep.mubr.bf16.mxu0 %v1343
    %1528 = vmatmul.mubr.bf16.gmra.mrb[0].mxu0 %v1342
    %v1529 = vpop.f32.mrb[0].mxu0
    %v1530 = vadd.f32 %v1378, %v1529
    %v1531 = vpop.f32.mrb[0].mxu0
    %v1532 = vadd.f32 %v1382, %v1531
    %v1533 = vpop.f32.mrb[0].mxu0
    %v1534 = vadd.f32 %v1378, %v1533
    %v1535 = vpop.f32.mrb[0].mxu0
    %v1536 = vadd.f32 %v1382, %v1535
    %1537 = vmatprep.mubr.bf16.mxu0 %v1347
    %1538 = vmatmul.mubr.bf16.gmra.mrb[0].mxu0 %v1346
    %v1539 = vpop.f32.mrb[0].mxu0
    %v1540 = vadd.f32 %v1378, %v1539
    %v1541 = vpop.f32.mrb[0].mxu0
    %v1542 = vadd.f32 %v1382, %v1541
    %v1543 = vpop.f32.mrb[0].mxu0
    %v1544 = vadd.f32 %v1378, %v1543
    %v1545 = vpop.f32.mrb[0].mxu0
    %v1546 = vadd.f32 %v1382, %v1545
    %1547 = vmatprep.mubr.bf16.mxu0 %v1351
    %1548 = vmatmul.mubr.bf16.gmra.mrb[0].mxu0 %v1350
    %v1549 = vpop.f32.mrb[0].mxu0
    %v1550 = vadd.f32 %v1378, %v1549
    %v1551 = vpop.f32.mrb[0].mxu0
    %v1552 = vadd.f32 %v1382, %v1551
    %v1553 = vpop.f32.mrb[0].mxu0
    %v1554 = vadd.f32 %v1378, %v1553
    %v1555 = vpop.f32.mrb[0].mxu0
    %v1556 = vadd.f32 %v1382, %v1555
    %1557 = vmatprep.mubr.bf16.mxu0 %v1355
    %1558 = vmatmul.mubr.bf16.gmra.mrb[0].mxu0 %v1354
    %v1559 = vpop.f32.mrb[0].mxu0
    %v1560 = vadd.f32 %v1378, %v1559
    %v1561 = vpop.f32.mrb[0].mxu0
    %v1562 = vadd.f32 %v1382, %v1561
    %v1563 = vpop.f32.mrb[0].mxu0
    %v1564 = vadd.f32 %v1378, %v1563
    %v1565 = vpop.f32.mrb[0].mxu0
    %v1566 = vadd.f32 %v1382, %v1565
    %1567 = vmatprep.mubr.bf16.mxu0 %v1359
    %1568 = vmatmul.mubr.bf16.gmra.mrb[0].mxu0 %v1358
    %v1569 = vpop.f32.mrb[0].mxu0
    %v1570 = vadd.f32 %v1378, %v1569
    %v1571 = vpop.f32.mrb[0].mxu0
    %v1572 = vadd.f32 %v1382, %v1571
    %v1573 = vpop.f32.mrb[0].mxu0
    %v1574 = vadd.f32 %v1378, %v1573
    %v1575 = vpop.f32.mrb[0].mxu0
    %v1576 = vadd.f32 %v1382, %v1575
    %1577 = vmatprep.mubr.bf16.mxu0 %v1363
    %1578 = vmatmul.mubr.bf16.gmra.mrb[0].mxu0 %v1362
    %v1579 = vpop.f32.mrb[0].mxu0
    %v1580 = vadd.f32 %v1378, %v1579
    %v1581 = vpop.f32.mrb[0].mxu0
    %v1582 = vadd.f32 %v1382, %v1581
    %v1583 = vpop.f32.mrb[0].mxu0
    %v1584 = vadd.f32 %v1378, %v1583
    %v1585 = vpop.f32.mrb[0].mxu0
    %v1586 = vadd.f32 %v1382, %v1585
    %1587 = vmatprep.mubr.bf16.mxu0 %v1367
    %1588 = vmatmul.mubr.bf16.gmra.mrb[0].mxu0 %v1366
    %v1589 = vpop.f32.mrb[0].mxu0
    %v1590 = vadd.f32 %v1378, %v1589
    %v1591 = vpop.f32.mrb[0].mxu0
    %v1592 = vadd.f32 %v1382, %v1591
    %v1593 = vpop.f32.mrb[0].mxu0
    %v1594 = vadd.f32 %v1378, %v1593
    %v1595 = vpop.f32.mrb[0].mxu0
    %v1596 = vadd.f32 %v1382, %v1595
    %1597 = vmatprep.mubr.bf16.mxu0 %v1371
    %1598 = vmatmul.mubr.bf16.gmra.mrb[0].mxu0 %v1370
    %v1599 = vpop.f32.mrb[0].mxu0
    %v1600 = vadd.f32 %v1378, %v1599
    %v1601 = vpop.f32.mrb[0].mxu0
    %v1602 = vadd.f32 %v1382, %v1601
    %v1603 = vpop.f32.mrb[0].mxu0
    %v1604 = vadd.f32 %v1378, %v1603
    %v1605 = vpop.f32.mrb[0].mxu0
    %v1606 = vadd.f32 %v1382, %v1605
    %1607 = vdwg.mxu0
    %1608 = vmatprep.subr.bf16.mxu0 %v549
    %1609 = vmatpush1.bf16.msra.mxu0 %v548
    %1610 = vmatprep.subr.bf16.mxu0 %v551
    %1611 = vmatpush1.bf16.msra.mxu0 %v550
    %1612 = vmatprep.subr.bf16.mxu0 %v553
    %1613 = vmatpush1.bf16.msra.mxu0 %v552
    %1614 = vmatprep.subr.bf16.mxu0 %v555
    %1615 = vmatpush1.bf16.msra.mxu0 %v554
    %1616 = vmatprep.subr.bf16.mxu0 %v557
    %1617 = vmatpush1.bf16.msra.mxu0 %v556
    %1618 = vmatprep.subr.bf16.mxu0 %v559
    %1619 = vmatpush1.bf16.msra.mxu0 %v558
    %1620 = vmatprep.subr.bf16.mxu0 %v561
    %1621 = vmatpush1.bf16.msra.mxu0 %v560
    %1622 = vmatprep.subr.bf16.mxu0 %v563
    %1623 = vmatpush1.bf16.msra.mxu0 %v562
    %1624 = vmatprep.subr.bf16.mxu0 %v565
    %1625 = vmatpush1.bf16.msra.mxu0 %v564
    %1626 = vmatprep.subr.bf16.mxu0 %v567
    %1627 = vmatpush1.bf16.msra.mxu0 %v566
    %1628 = vmatprep.subr.bf16.mxu0 %v569
    %1629 = vmatpush1.bf16.msra.mxu0 %v568
    %1630 = vmatprep.subr.bf16.mxu0 %v571
    %1631 = vmatpush1.bf16.msra.mxu0 %v570
    %1632 = vmatprep.subr.bf16.mxu0 %v573
    %1633 = vmatpush1.bf16.msra.mxu0 %v572
    %1634 = vmatprep.subr.bf16.mxu0 %v575
    %1635 = vmatpush1.bf16.msra.mxu0 %v574
    %1636 = vmatprep.subr.bf16.mxu0 %v577
    %1637 = vmatpush1.bf16.msra.mxu0 %v576
    %1638 = vmatprep.subr.bf16.mxu0 %v579
    %1639 = vmatpush1.bf16.msra.mxu0 %v578
    %1640 = vmatprep.mubr.bf16.mxu0 %v1301
    %1641 = vmatmul.mubr.bf16.gmra.mrb[0].mxu0 %v1300
    %v1642 = vpop.f32.mrb[0].mxu0
    %v1643 = vadd.f32 %v1420, %v1642
    %v1644 = vpop.f32.mrb[0].mxu0
    %v1645 = vadd.f32 %v1422, %v1644
    %v1646 = vpop.f32.mrb[0].mxu0
    %v1647 = vadd.f32 %v1424, %v1646
    %v1648 = vpop.f32.mrb[0].mxu0
    %v1649 = vadd.f32 %v1426, %v1648
    %1650 = vmatprep.mubr.bf16.mxu0 %v1305
    %1651 = vmatmul.mubr.bf16.gmra.mrb[0].mxu0 %v1304
    %v1652 = vpop.f32.mrb[0].mxu0
    %v1653 = vadd.f32 %v1430, %v1652
    %v1654 = vpop.f32.mrb[0].mxu0
    %v1655 = vadd.f32 %v1432, %v1654
    %v1656 = vpop.f32.mrb[0].mxu0
    %v1657 = vadd.f32 %v1434, %v1656
    %v1658 = vpop.f32.mrb[0].mxu0
    %v1659 = vadd.f32 %v1436, %v1658
    %1660 = vmatprep.mubr.bf16.mxu0 %v1309
    %1661 = vmatmul.mubr.bf16.gmra.mrb[0].mxu0 %v1308
    %v1662 = vpop.f32.mrb[0].mxu0
    %v1663 = vadd.f32 %v1440, %v1662
    %v1664 = vpop.f32.mrb[0].mxu0
    %v1665 = vadd.f32 %v1442, %v1664
    %v1666 = vpop.f32.mrb[0].mxu0
    %v1667 = vadd.f32 %v1444, %v1666
    %v1668 = vpop.f32.mrb[0].mxu0
    %v1669 = vadd.f32 %v1446, %v1668
    %1670 = vmatprep.mubr.bf16.mxu0 %v1313
    %1671 = vmatmul.mubr.bf16.gmra.mrb[0].mxu0 %v1312
    %v1672 = vpop.f32.mrb[0].mxu0
    %v1673 = vadd.f32 %v1450, %v1672
    %v1674 = vpop.f32.mrb[0].mxu0
    %v1675 = vadd.f32 %v1452, %v1674
    %v1676 = vpop.f32.mrb[0].mxu0
    %v1677 = vadd.f32 %v1454, %v1676
    %v1678 = vpop.f32.mrb[0].mxu0
    %v1679 = vadd.f32 %v1456, %v1678
    %1680 = vmatprep.mubr.bf16.mxu0 %v1317
    %1681 = vmatmul.mubr.bf16.gmra.mrb[0].mxu0 %v1316
    %v1682 = vpop.f32.mrb[0].mxu0
    %v1683 = vadd.f32 %v1460, %v1682
    %v1684 = vpop.f32.mrb[0].mxu0
    %v1685 = vadd.f32 %v1462, %v1684
    %v1686 = vpop.f32.mrb[0].mxu0
    %v1687 = vadd.f32 %v1464, %v1686
    %v1688 = vpop.f32.mrb[0].mxu0
    %v1689 = vadd.f32 %v1466, %v1688
    %1690 = vmatprep.mubr.bf16.mxu0 %v1321
    %1691 = vmatmul.mubr.bf16.gmra.mrb[0].mxu0 %v1320
    %v1692 = vpop.f32.mrb[0].mxu0
    %v1693 = vadd.f32 %v1470, %v1692
    %v1694 = vpop.f32.mrb[0].mxu0
    %v1695 = vadd.f32 %v1472, %v1694
    %v1696 = vpop.f32.mrb[0].mxu0
    %v1697 = vadd.f32 %v1474, %v1696
    %v1698 = vpop.f32.mrb[0].mxu0
    %v1699 = vadd.f32 %v1476, %v1698
    %1700 = vmatprep.mubr.bf16.mxu0 %v1325
    %1701 = vmatmul.mubr.bf16.gmra.mrb[0].mxu0 %v1324
    %v1702 = vpop.f32.mrb[0].mxu0
    %v1703 = vadd.f32 %v1480, %v1702
    %v1704 = vpop.f32.mrb[0].mxu0
    %v1705 = vadd.f32 %v1482, %v1704
    %v1706 = vpop.f32.mrb[0].mxu0
    %v1707 = vadd.f32 %v1484, %v1706
    %v1708 = vpop.f32.mrb[0].mxu0
    %v1709 = vadd.f32 %v1486, %v1708
    %1710 = vmatprep.mubr.bf16.mxu0 %v1329
    %1711 = vmatmul.mubr.bf16.gmra.mrb[0].mxu0 %v1328
    %v1712 = vpop.f32.mrb[0].mxu0
    %v1713 = vadd.f32 %v1490, %v1712
    %v1714 = vpop.f32.mrb[0].mxu0
    %v1715 = vadd.f32 %v1492, %v1714
    %v1716 = vpop.f32.mrb[0].mxu0
    %v1717 = vadd.f32 %v1494, %v1716
    %v1718 = vpop.f32.mrb[0].mxu0
    %v1719 = vadd.f32 %v1496, %v1718
    %1720 = vmatprep.mubr.bf16.mxu0 %v1333
    %1721 = vmatmul.mubr.bf16.gmra.mrb[0].mxu0 %v1332
    %v1722 = vpop.f32.mrb[0].mxu0
    %v1723 = vadd.f32 %v1500, %v1722
    %v1724 = vpop.f32.mrb[0].mxu0
    %v1725 = vadd.f32 %v1502, %v1724
    %v1726 = vpop.f32.mrb[0].mxu0
    %v1727 = vadd.f32 %v1504, %v1726
    %v1728 = vpop.f32.mrb[0].mxu0
    %v1729 = vadd.f32 %v1506, %v1728
    %1730 = vmatprep.mubr.bf16.mxu0 %v1337
    %1731 = vmatmul.mubr.bf16.gmra.mrb[0].mxu0 %v1336
    %v1732 = vpop.f32.mrb[0].mxu0
    %v1733 = vadd.f32 %v1510, %v1732
    %v1734 = vpop.f32.mrb[0].mxu0
    %v1735 = vadd.f32 %v1512, %v1734
    %v1736 = vpop.f32.mrb[0].mxu0
    %v1737 = vadd.f32 %v1514, %v1736
    %v1738 = vpop.f32.mrb[0].mxu0
    %v1739 = vadd.f32 %v1516, %v1738
    %1740 = vmatprep.mubr.bf16.mxu0 %v1341
    %1741 = vmatmul.mubr.bf16.gmra.mrb[0].mxu0 %v1340
    %v1742 = vpop.f32.mrb[0].mxu0
    %v1743 = vadd.f32 %v1520, %v1742
    %v1744 = vpop.f32.mrb[0].mxu0
    %v1745 = vadd.f32 %v1522, %v1744
    %v1746 = vpop.f32.mrb[0].mxu0
    %v1747 = vadd.f32 %v1524, %v1746
    %v1748 = vpop.f32.mrb[0].mxu0
    %v1749 = vadd.f32 %v1526, %v1748
    %1750 = vmatprep.mubr.bf16.mxu0 %v1345
    %1751 = vmatmul.mubr.bf16.gmra.mrb[0].mxu0 %v1344
    %v1752 = vpop.f32.mrb[0].mxu0
    %v1753 = vadd.f32 %v1530, %v1752
    %v1754 = vpop.f32.mrb[0].mxu0
    %v1755 = vadd.f32 %v1532, %v1754
    %v1756 = vpop.f32.mrb[0].mxu0
    %v1757 = vadd.f32 %v1534, %v1756
    %v1758 = vpop.f32.mrb[0].mxu0
    %v1759 = vadd.f32 %v1536, %v1758
    %1760 = vmatprep.mubr.bf16.mxu0 %v1349
    %1761 = vmatmul.mubr.bf16.gmra.mrb[0].mxu0 %v1348
    %v1762 = vpop.f32.mrb[0].mxu0
    %v1763 = vadd.f32 %v1540, %v1762
    %v1764 = vpop.f32.mrb[0].mxu0
    %v1765 = vadd.f32 %v1542, %v1764
    %v1766 = vpop.f32.mrb[0].mxu0
    %v1767 = vadd.f32 %v1544, %v1766
    %v1768 = vpop.f32.mrb[0].mxu0
    %v1769 = vadd.f32 %v1546, %v1768
    %1770 = vmatprep.mubr.bf16.mxu0 %v1353
    %1771 = vmatmul.mubr.bf16.gmra.mrb[0].mxu0 %v1352
    %v1772 = vpop.f32.mrb[0].mxu0
    %v1773 = vadd.f32 %v1550, %v1772
    %v1774 = vpop.f32.mrb[0].mxu0
    %v1775 = vadd.f32 %v1552, %v1774
    %v1776 = vpop.f32.mrb[0].mxu0
    %v1777 = vadd.f32 %v1554, %v1776
    %v1778 = vpop.f32.mrb[0].mxu0
    %v1779 = vadd.f32 %v1556, %v1778
    %1780 = vmatprep.mubr.bf16.mxu0 %v1357
    %1781 = vmatmul.mubr.bf16.gmra.mrb[0].mxu0 %v1356
    %v1782 = vpop.f32.mrb[0].mxu0
    %v1783 = vadd.f32 %v1560, %v1782
    %v1784 = vpop.f32.mrb[0].mxu0
    %v1785 = vadd.f32 %v1562, %v1784
    %v1786 = vpop.f32.mrb[0].mxu0
    %v1787 = vadd.f32 %v1564, %v1786
    %v1788 = vpop.f32.mrb[0].mxu0
    %v1789 = vadd.f32 %v1566, %v1788
    %1790 = vmatprep.mubr.bf16.mxu0 %v1361
    %1791 = vmatmul.mubr.bf16.gmra.mrb[0].mxu0 %v1360
    %v1792 = vpop.f32.mrb[0].mxu0
    %v1793 = vadd.f32 %v1570, %v1792
    %v1794 = vpop.f32.mrb[0].mxu0
    %v1795 = vadd.f32 %v1572, %v1794
    %v1796 = vpop.f32.mrb[0].mxu0
    %v1797 = vadd.f32 %v1574, %v1796
    %v1798 = vpop.f32.mrb[0].mxu0
    %v1799 = vadd.f32 %v1576, %v1798
    %1800 = vmatprep.mubr.bf16.mxu0 %v1365
    %1801 = vmatmul.mubr.bf16.gmra.mrb[0].mxu0 %v1364
    %v1802 = vpop.f32.mrb[0].mxu0
    %v1803 = vadd.f32 %v1580, %v1802
    %v1804 = vpop.f32.mrb[0].mxu0
    %v1805 = vadd.f32 %v1582, %v1804
    %v1806 = vpop.f32.mrb[0].mxu0
    %v1807 = vadd.f32 %v1584, %v1806
    %v1808 = vpop.f32.mrb[0].mxu0
    %v1809 = vadd.f32 %v1586, %v1808
    %1810 = vmatprep.mubr.bf16.mxu0 %v1369
    %1811 = vmatmul.mubr.bf16.gmra.mrb[0].mxu0 %v1368
    %v1812 = vpop.f32.mrb[0].mxu0
    %v1813 = vadd.f32 %v1590, %v1812
    %v1814 = vpop.f32.mrb[0].mxu0
    %v1815 = vadd.f32 %v1592, %v1814
    %v1816 = vpop.f32.mrb[0].mxu0
    %v1817 = vadd.f32 %v1594, %v1816
    %v1818 = vpop.f32.mrb[0].mxu0
    %v1819 = vadd.f32 %v1596, %v1818
    %1820 = vmatprep.mubr.bf16.mxu0 %v1373
    %1821 = vmatmul.mubr.bf16.gmra.mrb[0].mxu0 %v1372
    %v1822 = vpop.f32.mrb[0].mxu0
    %v1823 = vadd.f32 %v1600, %v1822
    %v1824 = vpop.f32.mrb[0].mxu0
    %v1825 = vadd.f32 %v1602, %v1824
    %v1826 = vpop.f32.mrb[0].mxu0
    %v1827 = vadd.f32 %v1604, %v1826
    %v1828 = vpop.f32.mrb[0].mxu0
    %v1829 = vadd.f32 %v1606, %v1828
    %1830 = vdwg.mxu0
    %v1831 = vmax.f32 %v1643, 0.0
    %v1832 = vmax.f32 %v1645, 0.0
    %v1833 = vmax.f32 %v1647, 0.0
    %v1834 = vmax.f32 %v1649, 0.0
    %v1835 = vmax.f32 %v1653, 0.0
    %v1836 = vmax.f32 %v1655, 0.0
    %v1837 = vmax.f32 %v1657, 0.0
    %v1838 = vmax.f32 %v1659, 0.0
    %v1839 = vmax.f32 %v1663, 0.0
    %v1840 = vmax.f32 %v1665, 0.0
    %v1841 = vmax.f32 %v1667, 0.0
    %v1842 = vmax.f32 %v1669, 0.0
    %v1843 = vmax.f32 %v1673, 0.0
    %v1844 = vmax.f32 %v1675, 0.0
    %v1845 = vmax.f32 %v1677, 0.0
    %v1846 = vmax.f32 %v1679, 0.0
    %v1847 = vmax.f32 %v1683, 0.0
    %v1848 = vmax.f32 %v1685, 0.0
    %v1849 = vmax.f32 %v1687, 0.0
    %v1850 = vmax.f32 %v1689, 0.0
    %v1851 = vmax.f32 %v1693, 0.0
    %v1852 = vmax.f32 %v1695, 0.0
    %v1853 = vmax.f32 %v1697, 0.0
    %v1854 = vmax.f32 %v1699, 0.0
    %v1855 = vmax.f32 %v1703, 0.0
    %v1856 = vmax.f32 %v1705, 0.0
    %v1857 = vmax.f32 %v1707, 0.0
    %v1858 = vmax.f32 %v1709, 0.0
    %v1859 = vmax.f32 %v1713, 0.0
    %v1860 = vmax.f32 %v1715, 0.0
    %v1861 = vmax.f32 %v1717, 0.0
    %v1862 = vmax.f32 %v1719, 0.0
    %v1863 = vmax.f32 %v1723, 0.0
    %v1864 = vmax.f32 %v1725, 0.0
    %v1865 = vmax.f32 %v1727, 0.0
    %v1866 = vmax.f32 %v1729, 0.0
    %v1867 = vmax.f32 %v1733, 0.0
    %v1868 = vmax.f32 %v1735, 0.0
    %v1869 = vmax.f32 %v1737, 0.0
    %v1870 = vmax.f32 %v1739, 0.0
    %v1871 = vmax.f32 %v1743, 0.0
    %v1872 = vmax.f32 %v1745, 0.0
    %v1873 = vmax.f32 %v1747, 0.0
    %v1874 = vmax.f32 %v1749, 0.0
    %v1875 = vmax.f32 %v1753, 0.0
    %v1876 = vmax.f32 %v1755, 0.0
    %v1877 = vmax.f32 %v1757, 0.0
    %v1878 = vmax.f32 %v1759, 0.0
    %v1879 = vmax.f32 %v1763, 0.0
    %v1880 = vmax.f32 %v1765, 0.0
    %v1881 = vmax.f32 %v1767, 0.0
    %v1882 = vmax.f32 %v1769, 0.0
    %v1883 = vmax.f32 %v1773, 0.0
    %v1884 = vmax.f32 %v1775, 0.0
    %v1885 = vmax.f32 %v1777, 0.0
    %v1886 = vmax.f32 %v1779, 0.0
    %v1887 = vmax.f32 %v1783, 0.0
    %v1888 = vmax.f32 %v1785, 0.0
    %v1889 = vmax.f32 %v1787, 0.0
    %v1890 = vmax.f32 %v1789, 0.0
    %v1891 = vmax.f32 %v1793, 0.0
    %v1892 = vmax.f32 %v1795, 0.0
    %v1893 = vmax.f32 %v1797, 0.0
    %v1894 = vmax.f32 %v1799, 0.0
    %v1895 = vmax.f32 %v1803, 0.0
    %v1896 = vmax.f32 %v1805, 0.0
    %v1897 = vmax.f32 %v1807, 0.0
    %v1898 = vmax.f32 %v1809, 0.0
    %v1899 = vmax.f32 %v1813, 0.0
    %v1900 = vmax.f32 %v1815, 0.0
    %v1901 = vmax.f32 %v1817, 0.0
    %v1902 = vmax.f32 %v1819, 0.0
    %v1903 = vmax.f32 %v1823, 0.0
    %v1904 = vmax.f32 %v1825, 0.0
    %v1905 = vmax.f32 %v1827, 0.0
    %v1906 = vmax.f32 %v1829, 0.0
    %v1907 = vpack.c.bf16 %v1833, %v1831
    %v1908 = vpack.c.bf16 %v1834, %v1832
    %v1909 = vpack.c.bf16 %v1837, %v1835
    %v1910 = vpack.c.bf16 %v1838, %v1836
    %v1911 = vpack.c.bf16 %v1841, %v1839
    %v1912 = vpack.c.bf16 %v1842, %v1840
    %v1913 = vpack.c.bf16 %v1845, %v1843
    %v1914 = vpack.c.bf16 %v1846, %v1844
    %v1915 = vpack.c.bf16 %v1849, %v1847
    %v1916 = vpack.c.bf16 %v1850, %v1848
    %v1917 = vpack.c.bf16 %v1853, %v1851
    %v1918 = vpack.c.bf16 %v1854, %v1852
    %v1919 = vpack.c.bf16 %v1857, %v1855
    %v1920 = vpack.c.bf16 %v1858, %v1856
    %v1921 = vpack.c.bf16 %v1861, %v1859
    %v1922 = vpack.c.bf16 %v1862, %v1860
    %v1923 = vpack.c.bf16 %v1865, %v1863
    %v1924 = vpack.c.bf16 %v1866, %v1864
    %v1925 = vpack.c.bf16 %v1869, %v1867
    %v1926 = vpack.c.bf16 %v1870, %v1868
    %v1927 = vpack.c.bf16 %v1873, %v1871
    %v1928 = vpack.c.bf16 %v1874, %v1872
    %v1929 = vpack.c.bf16 %v1877, %v1875
    %v1930 = vpack.c.bf16 %v1878, %v1876
    %v1931 = vpack.c.bf16 %v1881, %v1879
    %v1932 = vpack.c.bf16 %v1882, %v1880
    %v1933 = vpack.c.bf16 %v1885, %v1883
    %v1934 = vpack.c.bf16 %v1886, %v1884
    %v1935 = vpack.c.bf16 %v1889, %v1887
    %v1936 = vpack.c.bf16 %v1890, %v1888
    %v1937 = vpack.c.bf16 %v1893, %v1891
    %v1938 = vpack.c.bf16 %v1894, %v1892
    %v1939 = vpack.c.bf16 %v1897, %v1895
    %v1940 = vpack.c.bf16 %v1898, %v1896
    %v1941 = vpack.c.bf16 %v1901, %v1899
    %v1942 = vpack.c.bf16 %v1902, %v1900
    %v1943 = vpack.c.bf16 %v1905, %v1903
    %v1944 = vpack.c.bf16 %v1906, %v1904
    %v1946 = vlaneseq
    %v1947 = vshrl.u32 %v1946, 7
    %v1948 = vsub.s32 0, %v1947
    %v1949 = vrot.slane %v678, %v1948
    %v1950 = vlaneseq
    %v1951 = vshrl.u32 %v1950, 7
    %v1952 = vsub.s32 1, %v1951
    %v1953 = vrot.slane %v678, %v1952
    %1956 = vmatprep.subr.bf16.mxu0 %v645
    %1957 = vmatpush1.bf16.msra.mxu0 %v644
    %1958 = vmatprep.subr.bf16.mxu0 %v647
    %1959 = vmatpush1.bf16.msra.mxu0 %v646
    %1960 = vmatprep.subr.bf16.mxu0 %v649
    %1961 = vmatpush1.bf16.msra.mxu0 %v648
    %1962 = vmatprep.subr.bf16.mxu0 %v651
    %1963 = vmatpush1.bf16.msra.mxu0 %v650
    %1964 = vmatprep.subr.bf16.mxu0 %v653
    %1965 = vmatpush1.bf16.msra.mxu0 %v652
    %1966 = vmatprep.subr.bf16.mxu0 %v655
    %1967 = vmatpush1.bf16.msra.mxu0 %v654
    %1968 = vmatprep.subr.bf16.mxu0 %v657
    %1969 = vmatpush1.bf16.msra.mxu0 %v656
    %1970 = vmatprep.subr.bf16.mxu0 %v659
    %1971 = vmatpush1.bf16.msra.mxu0 %v658
    %1972 = vmatprep.subr.bf16.mxu0 %v661
    %1973 = vmatpush1.bf16.msra.mxu0 %v660
    %1974 = vmatprep.subr.bf16.mxu0 %v663
    %1975 = vmatpush1.bf16.msra.mxu0 %v662
    %1976 = vmatprep.subr.bf16.mxu0 %v665
    %1977 = vmatpush1.bf16.msra.mxu0 %v664
    %1978 = vmatprep.subr.bf16.mxu0 %v667
    %1979 = vmatpush1.bf16.msra.mxu0 %v666
    %1980 = vmatprep.subr.bf16.mxu0 %v669
    %1981 = vmatpush1.bf16.msra.mxu0 %v668
    %1982 = vmatprep.subr.bf16.mxu0 %v671
    %1983 = vmatpush1.bf16.msra.mxu0 %v670
    %1984 = vmatprep.subr.bf16.mxu0 %v673
    %1985 = vmatpush1.bf16.msra.mxu0 %v672
    %1986 = vmatprep.subr.bf16.mxu0 %v675
    %1987 = vmatpush1.bf16.msra.mxu0 %v674
    %1988 = vmatprep.mubr.bf16.mxu0 %v1908
    %1989 = vmatmul.mubr.bf16.gmra.mrb[0].mxu0 %v1907
    %v1990 = vpop.f32.mrb[0].mxu0
    %v1991 = vadd.f32 %v1949, %v1990
    %v1992 = vpop.f32.mrb[0].mxu0
    %v1993 = vadd.f32 %v1953, %v1992
    %v1994 = vpop.f32.mrb[0].mxu0
    %v1995 = vadd.f32 %v1949, %v1994
    %v1996 = vpop.f32.mrb[0].mxu0
    %v1997 = vadd.f32 %v1953, %v1996
    %1998 = vmatprep.mubr.bf16.mxu0 %v1910
    %1999 = vmatmul.mubr.bf16.gmra.mrb[0].mxu0 %v1909
    %v2000 = vpop.f32.mrb[0].mxu0
    %v2001 = vadd.f32 %v1949, %v2000
    %v2002 = vpop.f32.mrb[0].mxu0
    %v2003 = vadd.f32 %v1953, %v2002
    %v2004 = vpop.f32.mrb[0].mxu0
    %v2005 = vadd.f32 %v1949, %v2004
    %v2006 = vpop.f32.mrb[0].mxu0
    %v2007 = vadd.f32 %v1953, %v2006
    %2008 = vmatprep.mubr.bf16.mxu0 %v1912
    %2009 = vmatmul.mubr.bf16.gmra.mrb[0].mxu0 %v1911
    %v2010 = vpop.f32.mrb[0].mxu0
    %v2011 = vadd.f32 %v1949, %v2010
    %v2012 = vpop.f32.mrb[0].mxu0
    %v2013 = vadd.f32 %v1953, %v2012
    %v2014 = vpop.f32.mrb[0].mxu0
    %v2015 = vadd.f32 %v1949, %v2014
    %v2016 = vpop.f32.mrb[0].mxu0
    %v2017 = vadd.f32 %v1953, %v2016
    %2018 = vmatprep.mubr.bf16.mxu0 %v1914
    %2019 = vmatmul.mubr.bf16.gmra.mrb[0].mxu0 %v1913
    %v2020 = vpop.f32.mrb[0].mxu0
    %v2021 = vadd.f32 %v1949, %v2020
    %v2022 = vpop.f32.mrb[0].mxu0
    %v2023 = vadd.f32 %v1953, %v2022
    %v2024 = vpop.f32.mrb[0].mxu0
    %v2025 = vadd.f32 %v1949, %v2024
    %v2026 = vpop.f32.mrb[0].mxu0
    %v2027 = vadd.f32 %v1953, %v2026
    %2028 = vmatprep.mubr.bf16.mxu0 %v1916
    %2029 = vmatmul.mubr.bf16.gmra.mrb[0].mxu0 %v1915
    %v2030 = vpop.f32.mrb[0].mxu0
    %v2031 = vadd.f32 %v1949, %v2030
    %v2032 = vpop.f32.mrb[0].mxu0
    %v2033 = vadd.f32 %v1953, %v2032
    %v2034 = vpop.f32.mrb[0].mxu0
    %v2035 = vadd.f32 %v1949, %v2034
    %v2036 = vpop.f32.mrb[0].mxu0
    %v2037 = vadd.f32 %v1953, %v2036
    %2038 = vmatprep.mubr.bf16.mxu0 %v1918
    %2039 = vmatmul.mubr.bf16.gmra.mrb[0].mxu0 %v1917
    %v2040 = vpop.f32.mrb[0].mxu0
    %v2041 = vadd.f32 %v1949, %v2040
    %v2042 = vpop.f32.mrb[0].mxu0
    %v2043 = vadd.f32 %v1953, %v2042
    %v2044 = vpop.f32.mrb[0].mxu0
    %v2045 = vadd.f32 %v1949, %v2044
    %v2046 = vpop.f32.mrb[0].mxu0
    %v2047 = vadd.f32 %v1953, %v2046
    %2048 = vmatprep.mubr.bf16.mxu0 %v1920
    %2049 = vmatmul.mubr.bf16.gmra.mrb[0].mxu0 %v1919
    %v2050 = vpop.f32.mrb[0].mxu0
    %v2051 = vadd.f32 %v1949, %v2050
    %v2052 = vpop.f32.mrb[0].mxu0
    %v2053 = vadd.f32 %v1953, %v2052
    %v2054 = vpop.f32.mrb[0].mxu0
    %v2055 = vadd.f32 %v1949, %v2054
    %v2056 = vpop.f32.mrb[0].mxu0
    %v2057 = vadd.f32 %v1953, %v2056
    %2058 = vmatprep.mubr.bf16.mxu0 %v1922
    %2059 = vmatmul.mubr.bf16.gmra.mrb[0].mxu0 %v1921
    %v2060 = vpop.f32.mrb[0].mxu0
    %v2061 = vadd.f32 %v1949, %v2060
    %v2062 = vpop.f32.mrb[0].mxu0
    %v2063 = vadd.f32 %v1953, %v2062
    %v2064 = vpop.f32.mrb[0].mxu0
    %v2065 = vadd.f32 %v1949, %v2064
    %v2066 = vpop.f32.mrb[0].mxu0
    %v2067 = vadd.f32 %v1953, %v2066
    %2068 = vmatprep.mubr.bf16.mxu0 %v1924
    %2069 = vmatmul.mubr.bf16.gmra.mrb[0].mxu0 %v1923
    %v2070 = vpop.f32.mrb[0].mxu0
    %v2071 = vadd.f32 %v1949, %v2070
    %v2072 = vpop.f32.mrb[0].mxu0
    %v2073 = vadd.f32 %v1953, %v2072
    %v2074 = vpop.f32.mrb[0].mxu0
    %v2075 = vadd.f32 %v1949, %v2074
    %v2076 = vpop.f32.mrb[0].mxu0
    %v2077 = vadd.f32 %v1953, %v2076
    %2078 = vmatprep.mubr.bf16.mxu0 %v1926
    %2079 = vmatmul.mubr.bf16.gmra.mrb[0].mxu0 %v1925
    %v2080 = vpop.f32.mrb[0].mxu0
    %v2081 = vadd.f32 %v1949, %v2080
    %v2082 = vpop.f32.mrb[0].mxu0
    %v2083 = vadd.f32 %v1953, %v2082
    %v2084 = vpop.f32.mrb[0].mxu0
    %v2085 = vadd.f32 %v1949, %v2084
    %v2086 = vpop.f32.mrb[0].mxu0
    %v2087 = vadd.f32 %v1953, %v2086
    %2088 = vmatprep.mubr.bf16.mxu0 %v1928
    %2089 = vmatmul.mubr.bf16.gmra.mrb[0].mxu0 %v1927
    %v2090 = vpop.f32.mrb[0].mxu0
    %v2091 = vadd.f32 %v1949, %v2090
    %v2092 = vpop.f32.mrb[0].mxu0
    %v2093 = vadd.f32 %v1953, %v2092
    %v2094 = vpop.f32.mrb[0].mxu0
    %v2095 = vadd.f32 %v1949, %v2094
    %v2096 = vpop.f32.mrb[0].mxu0
    %v2097 = vadd.f32 %v1953, %v2096
    %2098 = vmatprep.mubr.bf16.mxu0 %v1930
    %2099 = vmatmul.mubr.bf16.gmra.mrb[0].mxu0 %v1929
    %v2100 = vpop.f32.mrb[0].mxu0
    %v2101 = vadd.f32 %v1949, %v2100
    %v2102 = vpop.f32.mrb[0].mxu0
    %v2103 = vadd.f32 %v1953, %v2102
    %v2104 = vpop.f32.mrb[0].mxu0
    %v2105 = vadd.f32 %v1949, %v2104
    %v2106 = vpop.f32.mrb[0].mxu0
    %v2107 = vadd.f32 %v1953, %v2106
    %2108 = vmatprep.mubr.bf16.mxu0 %v1932
    %2109 = vmatmul.mubr.bf16.gmra.mrb[0].mxu0 %v1931
    %v2110 = vpop.f32.mrb[0].mxu0
    %v2111 = vadd.f32 %v1949, %v2110
    %v2112 = vpop.f32.mrb[0].mxu0
    %v2113 = vadd.f32 %v1953, %v2112
    %v2114 = vpop.f32.mrb[0].mxu0
    %v2115 = vadd.f32 %v1949, %v2114
    %v2116 = vpop.f32.mrb[0].mxu0
    %v2117 = vadd.f32 %v1953, %v2116
    %2118 = vmatprep.mubr.bf16.mxu0 %v1934
    %2119 = vmatmul.mubr.bf16.gmra.mrb[0].mxu0 %v1933
    %v2120 = vpop.f32.mrb[0].mxu0
    %v2121 = vadd.f32 %v1949, %v2120
    %v2122 = vpop.f32.mrb[0].mxu0
    %v2123 = vadd.f32 %v1953, %v2122
    %v2124 = vpop.f32.mrb[0].mxu0
    %v2125 = vadd.f32 %v1949, %v2124
    %v2126 = vpop.f32.mrb[0].mxu0
    %v2127 = vadd.f32 %v1953, %v2126
    %2128 = vmatprep.mubr.bf16.mxu0 %v1936
    %2129 = vmatmul.mubr.bf16.gmra.mrb[0].mxu0 %v1935
    %v2130 = vpop.f32.mrb[0].mxu0
    %v2131 = vadd.f32 %v1949, %v2130
    %v2132 = vpop.f32.mrb[0].mxu0
    %v2133 = vadd.f32 %v1953, %v2132
    %v2134 = vpop.f32.mrb[0].mxu0
    %v2135 = vadd.f32 %v1949, %v2134
    %v2136 = vpop.f32.mrb[0].mxu0
    %v2137 = vadd.f32 %v1953, %v2136
    %2138 = vmatprep.mubr.bf16.mxu0 %v1938
    %2139 = vmatmul.mubr.bf16.gmra.mrb[0].mxu0 %v1937
    %v2140 = vpop.f32.mrb[0].mxu0
    %v2141 = vadd.f32 %v1949, %v2140
    %v2142 = vpop.f32.mrb[0].mxu0
    %v2143 = vadd.f32 %v1953, %v2142
    %v2144 = vpop.f32.mrb[0].mxu0
    %v2145 = vadd.f32 %v1949, %v2144
    %v2146 = vpop.f32.mrb[0].mxu0
    %v2147 = vadd.f32 %v1953, %v2146
    %2148 = vmatprep.mubr.bf16.mxu0 %v1940
    %2149 = vmatmul.mubr.bf16.gmra.mrb[0].mxu0 %v1939
    %v2150 = vpop.f32.mrb[0].mxu0
    %v2151 = vadd.f32 %v1949, %v2150
    %v2152 = vpop.f32.mrb[0].mxu0
    %v2153 = vadd.f32 %v1953, %v2152
    %v2154 = vpop.f32.mrb[0].mxu0
    %v2155 = vadd.f32 %v1949, %v2154
    %v2156 = vpop.f32.mrb[0].mxu0
    %v2157 = vadd.f32 %v1953, %v2156
    %2158 = vmatprep.mubr.bf16.mxu0 %v1942
    %2159 = vmatmul.mubr.bf16.gmra.mrb[0].mxu0 %v1941
    %v2160 = vpop.f32.mrb[0].mxu0
    %v2161 = vadd.f32 %v1949, %v2160
    %v2162 = vpop.f32.mrb[0].mxu0
    %v2163 = vadd.f32 %v1953, %v2162
    %v2164 = vpop.f32.mrb[0].mxu0
    %v2165 = vadd.f32 %v1949, %v2164
    %v2166 = vpop.f32.mrb[0].mxu0
    %v2167 = vadd.f32 %v1953, %v2166
    %2168 = vmatprep.mubr.bf16.mxu0 %v1944
    %2169 = vmatmul.mubr.bf16.gmra.mrb[0].mxu0 %v1943
    %v2170 = vpop.f32.mrb[0].mxu0
    %v2171 = vadd.f32 %v1949, %v2170
    %v2172 = vpop.f32.mrb[0].mxu0
    %v2173 = vadd.f32 %v1953, %v2172
    %v2174 = vpop.f32.mrb[0].mxu0
    %v2175 = vadd.f32 %v1949, %v2174
    %v2176 = vpop.f32.mrb[0].mxu0
    %v2177 = vadd.f32 %v1953, %v2176
    %2178 = vdwg.mxu0
    %2179 = vst [vmem:[#allocation10] sm:$0xff] %v1991
    %2180 = vst [vmem:[#allocation10 + $0x8] sm:$0xff] %v1993
    %2181 = vst [vmem:[#allocation10 + $0x10] sm:$0xff] %v1995
    %2182 = vst [vmem:[#allocation10 + $0x18] sm:$0xff] %v1997
    %2183 = vst [vmem:[#allocation10 + $0x20] sm:$0xff] %v2001
    %2184 = vst [vmem:[#allocation10 + $0x28] sm:$0xff] %v2003
    %2185 = vst [vmem:[#allocation10 + $0x30] sm:$0xff] %v2005
    %2186 = vst [vmem:[#allocation10 + $0x38] sm:$0xff] %v2007
    %2187 = vst [vmem:[#allocation10 + $0x40] sm:$0xff] %v2011
    %2188 = vst [vmem:[#allocation10 + $0x48] sm:$0xff] %v2013
    %2189 = vst [vmem:[#allocation10 + $0x50] sm:$0xff] %v2015
    %2190 = vst [vmem:[#allocation10 + $0x58] sm:$0xff] %v2017
    %2191 = vst [vmem:[#allocation10 + $0x60] sm:$0xff] %v2021
    %2192 = vst [vmem:[#allocation10 + $0x68] sm:$0xff] %v2023
    %2193 = vst [vmem:[#allocation10 + $0x70] sm:$0xff] %v2025
    %2194 = vst [vmem:[#allocation10 + $0x78] sm:$0xff] %v2027
    %2195 = vst [vmem:[#allocation10 + $0x80] sm:$0xff] %v2031
    %2196 = vst [vmem:[#allocation10 + $0x88] sm:$0xff] %v2033
    %2197 = vst [vmem:[#allocation10 + $0x90] sm:$0xff] %v2035
    %2198 = vst [vmem:[#allocation10 + $0x98] sm:$0xff] %v2037
    %2199 = vst [vmem:[#allocation10 + $0xa0] sm:$0xff] %v2041
    %2200 = vst [vmem:[#allocation10 + $0xa8] sm:$0xff] %v2043
    %2201 = vst [vmem:[#allocation10 + $0xb0] sm:$0xff] %v2045
    %2202 = vst [vmem:[#allocation10 + $0xb8] sm:$0xff] %v2047
    %2203 = vst [vmem:[#allocation10 + $0xc0] sm:$0xff] %v2051
    %2204 = vst [vmem:[#allocation10 + $0xc8] sm:$0xff] %v2053
    %2205 = vst [vmem:[#allocation10 + $0xd0] sm:$0xff] %v2055
    %2206 = vst [vmem:[#allocation10 + $0xd8] sm:$0xff] %v2057
    %2207 = vst [vmem:[#allocation10 + $0xe0] sm:$0xff] %v2061
    %2208 = vst [vmem:[#allocation10 + $0xe8] sm:$0xff] %v2063
    %2209 = vst [vmem:[#allocation10 + $0xf0] sm:$0xff] %v2065
    %2210 = vst [vmem:[#allocation10 + $0xf8] sm:$0xff] %v2067
    %2211 = vst [vmem:[#allocation10 + $0x100] sm:$0xff] %v2071
    %2212 = vst [vmem:[#allocation10 + $0x108] sm:$0xff] %v2073
    %2213 = vst [vmem:[#allocation10 + $0x110] sm:$0xff] %v2075
    %2214 = vst [vmem:[#allocation10 + $0x118] sm:$0xff] %v2077
    %2215 = vst [vmem:[#allocation10 + $0x120] sm:$0xff] %v2081
    %2216 = vst [vmem:[#allocation10 + $0x128] sm:$0xff] %v2083
    %2217 = vst [vmem:[#allocation10 + $0x130] sm:$0xff] %v2085
    %2218 = vst [vmem:[#allocation10 + $0x138] sm:$0xff] %v2087
    %2219 = vst [vmem:[#allocation10 + $0x140] sm:$0xff] %v2091
    %2220 = vst [vmem:[#allocation10 + $0x148] sm:$0xff] %v2093
    %2221 = vst [vmem:[#allocation10 + $0x150] sm:$0xff] %v2095
    %2222 = vst [vmem:[#allocation10 + $0x158] sm:$0xff] %v2097
    %2223 = vst [vmem:[#allocation10 + $0x160] sm:$0xff] %v2101
    %2224 = vst [vmem:[#allocation10 + $0x168] sm:$0xff] %v2103
    %2225 = vst [vmem:[#allocation10 + $0x170] sm:$0xff] %v2105
    %2226 = vst [vmem:[#allocation10 + $0x178] sm:$0xff] %v2107
    %2227 = vst [vmem:[#allocation10 + $0x180] sm:$0xff] %v2111
    %2228 = vst [vmem:[#allocation10 + $0x188] sm:$0xff] %v2113
    %2229 = vst [vmem:[#allocation10 + $0x190] sm:$0xff] %v2115
    %2230 = vst [vmem:[#allocation10 + $0x198] sm:$0xff] %v2117
    %2231 = vst [vmem:[#allocation10 + $0x1a0] sm:$0xff] %v2121
    %2232 = vst [vmem:[#allocation10 + $0x1a8] sm:$0xff] %v2123
    %2233 = vst [vmem:[#allocation10 + $0x1b0] sm:$0xff] %v2125
    %2234 = vst [vmem:[#allocation10 + $0x1b8] sm:$0xff] %v2127
    %2235 = vst [vmem:[#allocation10 + $0x1c0] sm:$0xff] %v2131
    %2236 = vst [vmem:[#allocation10 + $0x1c8] sm:$0xff] %v2133
    %2237 = vst [vmem:[#allocation10 + $0x1d0] sm:$0xff] %v2135
    %2238 = vst [vmem:[#allocation10 + $0x1d8] sm:$0xff] %v2137
    %2239 = vst [vmem:[#allocation10 + $0x1e0] sm:$0xff] %v2141
    %2240 = vst [vmem:[#allocation10 + $0x1e8] sm:$0xff] %v2143
    %2241 = vst [vmem:[#allocation10 + $0x1f0] sm:$0xff] %v2145
    %2242 = vst [vmem:[#allocation10 + $0x1f8] sm:$0xff] %v2147
    %2243 = vst [vmem:[#allocation10 + $0x200] sm:$0xff] %v2151
    %2244 = vst [vmem:[#allocation10 + $0x208] sm:$0xff] %v2153
    %2245 = vst [vmem:[#allocation10 + $0x210] sm:$0xff] %v2155
    %2246 = vst [vmem:[#allocation10 + $0x218] sm:$0xff] %v2157
    %2247 = vst [vmem:[#allocation10 + $0x220] sm:$0xff] %v2161
    %2248 = vst [vmem:[#allocation10 + $0x228] sm:$0xff] %v2163
    %2249 = vst [vmem:[#allocation10 + $0x230] sm:$0xff] %v2165
    %2250 = vst [vmem:[#allocation10 + $0x238] sm:$0xff] %v2167
    %2251 = vst [vmem:[#allocation10 + $0x240] sm:$0xff] %v2171
    %2252 = vst [vmem:[#allocation10 + $0x248] sm:$0xff] %v2173
    %2253 = vst [vmem:[#allocation10 + $0x250] sm:$0xff] %v2175
    %2254 = vst [vmem:[#allocation10 + $0x258] sm:$0xff] %v2177
    // Predicated region
    $region46: #{audio_enhancer_forward.1} parent=1 // pred_check
      _
    $region47: #{audio_enhancer_forward.1} parent=1 // pred_check_branch
      %2256 = sbr.rel (0) target = $region49
    $region48: #{audio_enhancer_forward.1} parent=1 // pred_region
      %s2258 = ssub.s32 9728, 9728
      %2259 = vsyncadd [#allocation4], %s2258
      %s2260 = sshll.u32 [#allocation10], 4
      %s2261 = int_to_ptr.vmem [resolvable:$true] %s2260
      %2266 = dma.vmem_to_hbm [thread:$0]  %s2261, 9728, %s7, [#allocation4], 256, 256, 16
    $region49: #{audio_enhancer_forward.1} parent=1 // pred_fallthru
      _
    // Predicated region
    $region50: #{audio_enhancer_forward.1} parent=1 // pred_check
      _
    $region51: #{audio_enhancer_forward.1} parent=1 // pred_check_branch
      %2268 = sbr.rel (0) target = $region53
    $region52: #{audio_enhancer_forward.1} parent=1 // pred_region
      %2269 = dma.done [#allocation4], 9728
    $region53: #{audio_enhancer_forward.1} parent=1 // pred_fallthru
      _
    %2270 = vsyncpa [#allocation3], 1
    %2271 = vsyncpa [#allocation6], 1
    %2272 = vsyncpa [#allocation9], 1
    %2273 = vsyncpa [#allocation4], 1

</llo_original>
